<compile_context>
chip_gen: v5e
topology: v5e:2x2
jax: 0.10.0
libtpu: 0.0.40
codegen_flags: <defaults>
</compile_context>

<pallas_src>
import math

import jax
import jax.numpy as jnp
from jax.experimental import pallas as pl
from jax.experimental.pallas import tpu as pltpu

N_HEADS = 2
LN_EPS = 1e-5
BN_EPS = 1e-5

# Row layout of the packed (K, H) small-vector array ("vecs").
ROW_FC1_B = 0        # fc1 bias with eval-mode BatchNorm folded in
ROW_LNF_G = 1        # final LayerNorm gamma
ROW_LNF_B = 2        # final LayerNorm beta
ROW_FC2_B = 3        # fc2 bias, zero-padded to width H
ROW_LAYER0 = 4
ROWS_PER_LAYER = 9   # q_b, k_b, v_b, o_b, ln1_g, ln1_b, ln2_g, ln2_b, ff2_b

PARAM_ORDER = ("fc1_w", "qkv_w", "o_w", "ff1_w", "ff1_b", "ff2_w", "fc2_w", "vecs")


def _forward_math(x, fc1_w, qkv_w, o_w, ff1_w, ff1_b, ff2_w, fc2_w, vecs, *, recip):
    """Full model math (shared by the Pallas kernel and the pure-JAX reference)."""
    n_layers, H, _ = qkv_w.shape
    hd = H // N_HEADS
    out_dim = fc2_w.shape[1]
    attn_scale = 1.0 / math.sqrt(hd)

    def row(i):                      # (1, H) static slice of the packed vectors
        return vecs[i:i + 1, :]

    def layer_norm(h, g, b):
        mu = jnp.mean(h, axis=-1, keepdims=True)
        var = jnp.mean((h - mu) ** 2, axis=-1, keepdims=True)
        return (h - mu) * jax.lax.rsqrt(var + LN_EPS) * g + b

    def bdot(a, w):                  # f32 activation @ bf16 weight, f32 accum
        return jax.lax.dot_general(a.astype(w.dtype), w, (((1,), (0,)), ((), ())),
                                   preferred_element_type=jnp.float32)

    # fc1 (with folded eval-mode BatchNorm) -> relu
    h = jnp.dot(x, fc1_w, preferred_element_type=jnp.float32) + row(ROW_FC1_B)
    h = jnp.maximum(h, 0.0)

    # post-norm TransformerEncoderLayer x n_layers (dropout == identity in eval)
    for l in range(n_layers):
        base = ROW_LAYER0 + l * ROWS_PER_LAYER
        # fused QKV projection: one (N,H)@(H,3H) matmul, then slice q/k/v
        qkv = bdot(h, qkv_w[l])
        q = qkv[:, 0:H] + row(base + 0)
        k = qkv[:, H:2 * H] + row(base + 1)
        v = qkv[:, 2 * H:3 * H] + row(base + 2)

        ctx_heads = []
        for hh in range(N_HEADS):
            sl = slice(hh * hd, (hh + 1) * hd)
            qh = q[:, sl] * attn_scale
            kh = k[:, sl]
            vh = v[:, sl]
            # scores = qh @ kh^T without an explicit transpose
            scores = jax.lax.dot_general(qh, kh, (((1,), (1,)), ((), ())),
                                         preferred_element_type=jnp.float32)
            m = jnp.max(scores, axis=-1, keepdims=True)
            e = jnp.exp(scores - m)
            p = e * recip(jnp.sum(e, axis=-1, keepdims=True))
            ctx_heads.append(jnp.dot(p, vh, preferred_element_type=jnp.float32))
        ctx = jnp.concatenate(ctx_heads, axis=-1)              # (N, H)
        attn = bdot(ctx, o_w[l]) + row(base + 3)               # fused out-projection
        h = layer_norm(h + attn, row(base + 4), row(base + 5))

        f = bdot(h, ff1_w[l]) + ff1_b[l]
        f = jnp.maximum(f, 0.0)
        # ff2_w stored lane-dense as (H, F): contract both last dims
        f = jax.lax.dot_general(f.astype(ff2_w.dtype), ff2_w[l],
                                (((1,), (1,)), ((), ())),
                                preferred_element_type=jnp.float32) + row(base + 8)
        h = layer_norm(h + f, row(base + 6), row(base + 7))

    # final LayerNorm -> fc2 -> sigmoid
    h = layer_norm(h, row(ROW_LNF_G), row(ROW_LNF_B))
    y = jnp.dot(h, fc2_w, preferred_element_type=jnp.float32) + row(ROW_FC2_B)[:, :out_dim]
    return recip(1.0 + jnp.exp(-y))


def transformer_kernel(x_ref, fc1_w_ref, qkv_w_ref, o_w_ref, ff1_w_ref,
                       ff1_b_ref, ff2_w_ref, fc2_w_ref, vecs_ref, out_ref):
    out_ref[...] = _forward_math(
        x_ref[...], fc1_w_ref[...], qkv_w_ref[...], o_w_ref[...],
        ff1_w_ref[...], ff1_b_ref[...], ff2_w_ref[...], fc2_w_ref[...],
        vecs_ref[...],
        recip=lambda t: pl.reciprocal(t, approx=True))


def transformer_forward(x, params):
    """Single fused Pallas kernel: whole model is VMEM-resident (tiny shapes)."""
    # TODO(synk): if N ever grows to hundreds of rows, add a 1-D row grid with
    #             dimension_semantics=("parallel",) so v7x's 2nd TensorCore is used.
    args = (x,) + tuple(params[k] for k in PARAM_ORDER)
    n = x.shape[0]
    d_out = params["fc2_w"].shape[1]
    return pl.pallas_call(
        transformer_kernel,
        out_shape=jax.ShapeDtypeStruct((n, d_out), jnp.float32),
        in_specs=[pl.BlockSpec(memory_space=pltpu.MemorySpace.VMEM)] * len(args),
        out_specs=pl.BlockSpec(memory_space=pltpu.MemorySpace.VMEM),
    )(*args)


def init_params(key, input_dim, hidden_dim, output_dim,
                n_layers=2, dim_feedforward=2048):
    """Deterministic synthetic params, PyTorch-shaped then rearranged for the kernel."""
    H = hidden_dim
    assert H % N_HEADS == 0 and output_dim <= H
    keys = iter(jax.random.split(key, 64))

    def u(shape, fan_in):
        b = 1.0 / math.sqrt(fan_in)
        return jax.random.uniform(next(keys), shape, jnp.float32, -b, b)

    # ---- PyTorch-shaped parameters (shapes from TransformerModel.__init__) ----
    fc1_w = u((H, input_dim), input_dim)          # nn.Linear(input_dim, H)
    fc1_b = u((H,), input_dim)
    bn_g = jnp.ones((H,), jnp.float32)            # nn.BatchNorm1d(H)
    bn_b = jnp.zeros((H,), jnp.float32)
    layers = []
    for _ in range(n_layers):                     # nn.TransformerEncoderLayer x2
        in_proj_w = u((3 * H, H), H)
        in_proj_b = u((3 * H,), H)
        out_w = u((H, H), H)
        out_b = u((H,), H)
        l1_w = u((dim_feedforward, H), H)
        l1_b = u((dim_feedforward,), H)
        l2_w = u((H, dim_feedforward), dim_feedforward)
        l2_b = u((H,), dim_feedforward)
        layers.append((in_proj_w, in_proj_b, out_w, out_b, l1_w, l1_b, l2_w, l2_b))
    lnf_g = jnp.ones((H,), jnp.float32)           # nn.LayerNorm(H)
    lnf_b = jnp.zeros((H,), jnp.float32)
    fc2_w = u((output_dim, H), H)                 # nn.Linear(H, output_dim)
    fc2_b = u((output_dim,), H)

    # ---- fold eval-mode BatchNorm (running mean=0, var=1) into fc1 ----
    bn_scale = bn_g / jnp.sqrt(1.0 + BN_EPS)
    fc1_w_f = fc1_w.T * bn_scale[None, :]         # (input_dim, H)
    fc1_b_f = fc1_b * bn_scale + bn_b             # (H,)

    # ---- pack all tiny (·,H)-wide vectors into one (4 + 9*n_layers, H) array ----
    ones_h = jnp.ones((H,), jnp.float32)
    zeros_h = jnp.zeros((H,), jnp.float32)
    rows = [fc1_b_f, lnf_g, lnf_b, jnp.pad(fc2_b, (0, H - output_dim))]
    for (ipw, ipb, ow, ob, l1w, l1b, l2w, l2b) in layers:
        rows += [ipb[:H], ipb[H:2 * H], ipb[2 * H:], ob,
                 ones_h, zeros_h, ones_h, zeros_h, l2b]
    vecs = jnp.stack(rows)                        # (22, H) f32

    bf16 = jnp.bfloat16
    params = {
        "fc1_w": fc1_w_f,                                               # (in, H) f32
        "qkv_w": jnp.stack([l[0].T for l in layers]).astype(bf16),      # (L, H, 3H)
        "o_w": jnp.stack([l[2].T for l in layers]).astype(bf16),        # (L, H, H)
        "ff1_w": jnp.stack([l[4].T for l in layers]).astype(bf16),      # (L, H, F)
        "ff1_b": jnp.stack([l[5][None] for l in layers]),               # (L, 1, F) f32
        "ff2_w": jnp.stack([l[6] for l in layers]).astype(bf16),        # (L, H, F) lane-dense
        "fc2_w": fc2_w.T,                                               # (H, out) f32
        "vecs": vecs,                                                   # (22, H) f32
    }
    return params


if __name__ == "__main__":
    N, INPUT_DIM, HIDDEN_DIM, OUTPUT_DIM = 8, 16, 32, 8

    key = jax.random.PRNGKey(0)
    kx, kp = jax.random.split(key)
    x = jax.random.normal(kx, (N, INPUT_DIM), jnp.float32)
    params = init_params(kp, INPUT_DIM, HIDDEN_DIM, OUTPUT_DIM)

    out = jax.block_until_ready(transformer_forward(x, params))

    # Pure-JAX reference of the same (bf16-weight) math, exact reciprocals.
    ref = _forward_math(x, *(params[k] for k in PARAM_ORDER),
                        recip=lambda t: 1.0 / t)
    assert out.shape == (N, OUTPUT_DIM)
    assert bool(jnp.all(jnp.isfinite(out)))
    assert bool(jnp.allclose(out, ref, rtol=1e-2, atol=1e-2)), \
        float(jnp.max(jnp.abs(out - ref)))

    print("KERNEL_OK")
</pallas_src>

<mosaic_0001>
module attributes {stable_mosaic.version = 11 : i64} {
  func.func @transformer_kernel(%arg0: memref<8x16xf32, #tpu.memory_space<vmem>>, %arg1: memref<16x32xf32, #tpu.memory_space<vmem>>, %arg2: memref<2x32x96xbf16, #tpu.memory_space<vmem>>, %arg3: memref<2x32x32xbf16, #tpu.memory_space<vmem>>, %arg4: memref<2x32x2048xbf16, #tpu.memory_space<vmem>>, %arg5: memref<2x1x2048xf32, #tpu.memory_space<vmem>>, %arg6: memref<2x32x2048xbf16, #tpu.memory_space<vmem>>, %arg7: memref<32x8xf32, #tpu.memory_space<vmem>>, %arg8: memref<22x32xf32, #tpu.memory_space<vmem>>, %arg9: memref<8x8xf32, #tpu.memory_space<vmem>>) attributes {dimension_semantics = [], scalar_prefetch = 0 : i64, scratch_operands = 0 : i64, tpu.core_type = #tpu.core_type<tc>} {
    %c0 = arith.constant 0 : index
    %c0_0 = arith.constant 0 : index
    %0 = vector.load %arg0[%c0, %c0_0] : memref<8x16xf32, #tpu.memory_space<vmem>>, vector<8x16xf32>
    %c0_1 = arith.constant 0 : index
    %c0_2 = arith.constant 0 : index
    %1 = vector.load %arg1[%c0_1, %c0_2] : memref<16x32xf32, #tpu.memory_space<vmem>>, vector<16x32xf32>
    %c0_3 = arith.constant 0 : index
    %c0_4 = arith.constant 0 : index
    %c0_5 = arith.constant 0 : index
    %2 = vector.load %arg2[%c0_3, %c0_4, %c0_5] : memref<2x32x96xbf16, #tpu.memory_space<vmem>>, vector<2x32x96xbf16>
    %c0_6 = arith.constant 0 : index
    %c0_7 = arith.constant 0 : index
    %c0_8 = arith.constant 0 : index
    %3 = vector.load %arg3[%c0_6, %c0_7, %c0_8] : memref<2x32x32xbf16, #tpu.memory_space<vmem>>, vector<2x32x32xbf16>
    %c0_9 = arith.constant 0 : index
    %c0_10 = arith.constant 0 : index
    %c0_11 = arith.constant 0 : index
    %4 = vector.load %arg4[%c0_9, %c0_10, %c0_11] : memref<2x32x2048xbf16, #tpu.memory_space<vmem>>, vector<2x32x2048xbf16>
    %c0_12 = arith.constant 0 : index
    %c0_13 = arith.constant 0 : index
    %c0_14 = arith.constant 0 : index
    %5 = vector.load %arg5[%c0_12, %c0_13, %c0_14] : memref<2x1x2048xf32, #tpu.memory_space<vmem>>, vector<2x1x2048xf32>
    %c0_15 = arith.constant 0 : index
    %c0_16 = arith.constant 0 : index
    %c0_17 = arith.constant 0 : index
    %6 = vector.load %arg6[%c0_15, %c0_16, %c0_17] : memref<2x32x2048xbf16, #tpu.memory_space<vmem>>, vector<2x32x2048xbf16>
    %c0_18 = arith.constant 0 : index
    %c0_19 = arith.constant 0 : index
    %7 = vector.load %arg7[%c0_18, %c0_19] : memref<32x8xf32, #tpu.memory_space<vmem>>, vector<32x8xf32>
    %c0_20 = arith.constant 0 : index
    %c0_21 = arith.constant 0 : index
    %8 = vector.load %arg8[%c0_20, %c0_21] : memref<22x32xf32, #tpu.memory_space<vmem>>, vector<22x32xf32>
    %cst = arith.constant dense<0.000000e+00> : vector<8x32xf32>
    %9 = tpu.matmul %0, %1, %cst {dimension_numbers = #tpu.dot_dimension_numbers<[1], [0], [0], [1], [0, 0, 1, 1], [], []>} : vector<8x16xf32>, vector<16x32xf32>, vector<8x32xf32> -> vector<8x32xf32>
    %10 = vector.extract_strided_slice %8 {offsets = [0, 0], sizes = [1, 32], strides = [1, 1]} : vector<22x32xf32> to vector<1x32xf32>
    %11 = vector.broadcast %10 : vector<1x32xf32> to vector<8x32xf32>
    %12 = arith.addf %9, %11 : vector<8x32xf32>
    %cst_22 = arith.constant 0.000000e+00 : f32
    %13 = vector.broadcast %cst_22 : f32 to vector<8x32xf32>
    %14 = arith.maximumf %12, %13 : vector<8x32xf32>
    %15 = vector.extract_strided_slice %2 {offsets = [0, 0, 0], sizes = [1, 32, 96], strides = [1, 1, 1]} : vector<2x32x96xbf16> to vector<1x32x96xbf16>
    %16 = vector.shape_cast %15 : vector<1x32x96xbf16> to vector<32x96xbf16>
    %17 = arith.truncf %14 : vector<8x32xf32> to vector<8x32xbf16>
    %cst_23 = arith.constant dense<0.000000e+00> : vector<8x96xf32>
    %18 = tpu.matmul %17, %16, %cst_23 {dimension_numbers = #tpu.dot_dimension_numbers<[1], [0], [0], [1], [0, 0, 1, 1], [], []>} : vector<8x32xbf16>, vector<32x96xbf16>, vector<8x96xf32> -> vector<8x96xf32>
    %19 = vector.extract_strided_slice %18 {offsets = [0, 0], sizes = [8, 32], strides = [1, 1]} : vector<8x96xf32> to vector<8x32xf32>
    %20 = vector.extract_strided_slice %8 {offsets = [4, 0], sizes = [1, 32], strides = [1, 1]} : vector<22x32xf32> to vector<1x32xf32>
    %21 = vector.broadcast %20 : vector<1x32xf32> to vector<8x32xf32>
    %22 = arith.addf %19, %21 : vector<8x32xf32>
    %23 = vector.extract_strided_slice %18 {offsets = [0, 32], sizes = [8, 32], strides = [1, 1]} : vector<8x96xf32> to vector<8x32xf32>
    %24 = vector.extract_strided_slice %8 {offsets = [5, 0], sizes = [1, 32], strides = [1, 1]} : vector<22x32xf32> to vector<1x32xf32>
    %25 = vector.broadcast %24 : vector<1x32xf32> to vector<8x32xf32>
    %26 = arith.addf %23, %25 : vector<8x32xf32>
    %27 = vector.extract_strided_slice %18 {offsets = [0, 64], sizes = [8, 32], strides = [1, 1]} : vector<8x96xf32> to vector<8x32xf32>
    %28 = vector.extract_strided_slice %8 {offsets = [6, 0], sizes = [1, 32], strides = [1, 1]} : vector<22x32xf32> to vector<1x32xf32>
    %29 = vector.broadcast %28 : vector<1x32xf32> to vector<8x32xf32>
    %30 = arith.addf %27, %29 : vector<8x32xf32>
    %31 = vector.extract_strided_slice %22 {offsets = [0, 0], sizes = [8, 16], strides = [1, 1]} : vector<8x32xf32> to vector<8x16xf32>
    %cst_24 = arith.constant 2.500000e-01 : f32
    %32 = vector.broadcast %cst_24 : f32 to vector<8x16xf32>
    %33 = arith.mulf %31, %32 : vector<8x16xf32>
    %34 = vector.extract_strided_slice %26 {offsets = [0, 0], sizes = [8, 16], strides = [1, 1]} : vector<8x32xf32> to vector<8x16xf32>
    %35 = vector.extract_strided_slice %30 {offsets = [0, 0], sizes = [8, 16], strides = [1, 1]} : vector<8x32xf32> to vector<8x16xf32>
    %cst_25 = arith.constant dense<0.000000e+00> : vector<8x8xf32>
    %36 = tpu.matmul %33, %34, %cst_25 {dimension_numbers = #tpu.dot_dimension_numbers<[1], [1], [0], [0], [0, 0, 1, 0], [], []>} : vector<8x16xf32>, vector<8x16xf32>, vector<8x8xf32> -> vector<8x8xf32>
    %cst_26 = arith.constant dense<0xFF800000> : vector<8xf32>
    %37 = vector.multi_reduction <maximumf>, %36, %cst_26 [1] : vector<8x8xf32> to vector<8xf32>
    %38 = vector.shape_cast %37 : vector<8xf32> to vector<8x1xf32>
    %39 = vector.broadcast %38 : vector<8x1xf32> to vector<8x8xf32>
    %40 = arith.subf %36, %39 : vector<8x8xf32>
    %41 = math.exp %40 : vector<8x8xf32>
    %cst_27 = arith.constant dense<0.000000e+00> : vector<8xf32>
    %42 = vector.multi_reduction <add>, %41, %cst_27 [1] : vector<8x8xf32> to vector<8xf32>
    %43 = vector.shape_cast %42 : vector<8xf32> to vector<8x1xf32>
    %44 = tpu.reciprocal %43 {approx = true} : vector<8x1xf32> -> vector<8x1xf32>
    %45 = vector.broadcast %44 : vector<8x1xf32> to vector<8x8xf32>
    %46 = arith.mulf %41, %45 : vector<8x8xf32>
    %cst_28 = arith.constant dense<0.000000e+00> : vector<8x16xf32>
    %47 = tpu.matmul %46, %35, %cst_28 {dimension_numbers = #tpu.dot_dimension_numbers<[1], [0], [0], [1], [0, 0, 1, 1], [], []>} : vector<8x8xf32>, vector<8x16xf32>, vector<8x16xf32> -> vector<8x16xf32>
    %48 = vector.extract_strided_slice %22 {offsets = [0, 16], sizes = [8, 16], strides = [1, 1]} : vector<8x32xf32> to vector<8x16xf32>
    %cst_29 = arith.constant 2.500000e-01 : f32
    %49 = vector.broadcast %cst_29 : f32 to vector<8x16xf32>
    %50 = arith.mulf %48, %49 : vector<8x16xf32>
    %51 = vector.extract_strided_slice %26 {offsets = [0, 16], sizes = [8, 16], strides = [1, 1]} : vector<8x32xf32> to vector<8x16xf32>
    %52 = vector.extract_strided_slice %30 {offsets = [0, 16], sizes = [8, 16], strides = [1, 1]} : vector<8x32xf32> to vector<8x16xf32>
    %cst_30 = arith.constant dense<0.000000e+00> : vector<8x8xf32>
    %53 = tpu.matmul %50, %51, %cst_30 {dimension_numbers = #tpu.dot_dimension_numbers<[1], [1], [0], [0], [0, 0, 1, 0], [], []>} : vector<8x16xf32>, vector<8x16xf32>, vector<8x8xf32> -> vector<8x8xf32>
    %cst_31 = arith.constant dense<0xFF800000> : vector<8xf32>
    %54 = vector.multi_reduction <maximumf>, %53, %cst_31 [1] : vector<8x8xf32> to vector<8xf32>
    %55 = vector.shape_cast %54 : vector<8xf32> to vector<8x1xf32>
    %56 = vector.broadcast %55 : vector<8x1xf32> to vector<8x8xf32>
    %57 = arith.subf %53, %56 : vector<8x8xf32>
    %58 = math.exp %57 : vector<8x8xf32>
    %cst_32 = arith.constant dense<0.000000e+00> : vector<8xf32>
    %59 = vector.multi_reduction <add>, %58, %cst_32 [1] : vector<8x8xf32> to vector<8xf32>
    %60 = vector.shape_cast %59 : vector<8xf32> to vector<8x1xf32>
    %61 = tpu.reciprocal %60 {approx = true} : vector<8x1xf32> -> vector<8x1xf32>
    %62 = vector.broadcast %61 : vector<8x1xf32> to vector<8x8xf32>
    %63 = arith.mulf %58, %62 : vector<8x8xf32>
    %cst_33 = arith.constant dense<0.000000e+00> : vector<8x16xf32>
    %64 = tpu.matmul %63, %52, %cst_33 {dimension_numbers = #tpu.dot_dimension_numbers<[1], [0], [0], [1], [0, 0, 1, 1], [], []>} : vector<8x8xf32>, vector<8x16xf32>, vector<8x16xf32> -> vector<8x16xf32>
    %65 = tpu.concatenate %47, %64 in 1 : vector<8x16xf32>, vector<8x16xf32> -> vector<8x32xf32>
    %66 = vector.extract_strided_slice %3 {offsets = [0, 0, 0], sizes = [1, 32, 32], strides = [1, 1, 1]} : vector<2x32x32xbf16> to vector<1x32x32xbf16>
    %67 = vector.shape_cast %66 : vector<1x32x32xbf16> to vector<32x32xbf16>
    %68 = arith.truncf %65 : vector<8x32xf32> to vector<8x32xbf16>
    %cst_34 = arith.constant dense<0.000000e+00> : vector<8x32xf32>
    %69 = tpu.matmul %68, %67, %cst_34 {dimension_numbers = #tpu.dot_dimension_numbers<[1], [0], [0], [1], [0, 0, 1, 1], [], []>} : vector<8x32xbf16>, vector<32x32xbf16>, vector<8x32xf32> -> vector<8x32xf32>
    %70 = vector.extract_strided_slice %8 {offsets = [7, 0], sizes = [1, 32], strides = [1, 1]} : vector<22x32xf32> to vector<1x32xf32>
    %71 = vector.broadcast %70 : vector<1x32xf32> to vector<8x32xf32>
    %72 = arith.addf %69, %71 : vector<8x32xf32>
    %73 = arith.addf %14, %72 : vector<8x32xf32>
    %74 = vector.extract_strided_slice %8 {offsets = [8, 0], sizes = [1, 32], strides = [1, 1]} : vector<22x32xf32> to vector<1x32xf32>
    %75 = vector.extract_strided_slice %8 {offsets = [9, 0], sizes = [1, 32], strides = [1, 1]} : vector<22x32xf32> to vector<1x32xf32>
    %cst_35 = arith.constant dense<0.000000e+00> : vector<8xf32>
    %76 = vector.multi_reduction <add>, %73, %cst_35 [1] : vector<8x32xf32> to vector<8xf32>
    %77 = vector.shape_cast %76 : vector<8xf32> to vector<8x1xf32>
    %cst_36 = arith.constant 3.200000e+01 : f32
    %78 = vector.broadcast %cst_36 : f32 to vector<8x1xf32>
    %79 = arith.divf %77, %78 : vector<8x1xf32>
    %80 = vector.broadcast %79 : vector<8x1xf32> to vector<8x32xf32>
    %81 = arith.subf %73, %80 : vector<8x32xf32>
    %82 = arith.mulf %81, %81 : vector<8x32xf32>
    %cst_37 = arith.constant dense<0.000000e+00> : vector<8xf32>
    %83 = vector.multi_reduction <add>, %82, %cst_37 [1] : vector<8x32xf32> to vector<8xf32>
    %84 = vector.shape_cast %83 : vector<8xf32> to vector<8x1xf32>
    %cst_38 = arith.constant 3.200000e+01 : f32
    %85 = vector.broadcast %cst_38 : f32 to vector<8x1xf32>
    %86 = arith.divf %84, %85 : vector<8x1xf32>
    %87 = vector.broadcast %79 : vector<8x1xf32> to vector<8x32xf32>
    %88 = arith.subf %73, %87 : vector<8x32xf32>
    %cst_39 = arith.constant 9.99999974E-6 : f32
    %89 = vector.broadcast %cst_39 : f32 to vector<8x1xf32>
    %90 = arith.addf %86, %89 : vector<8x1xf32>
    %91 = math.rsqrt %90 : vector<8x1xf32>
    %92 = vector.broadcast %91 : vector<8x1xf32> to vector<8x32xf32>
    %93 = arith.mulf %88, %92 : vector<8x32xf32>
    %94 = vector.broadcast %74 : vector<1x32xf32> to vector<8x32xf32>
    %95 = arith.mulf %93, %94 : vector<8x32xf32>
    %96 = vector.broadcast %75 : vector<1x32xf32> to vector<8x32xf32>
    %97 = arith.addf %95, %96 : vector<8x32xf32>
    %98 = vector.extract_strided_slice %4 {offsets = [0, 0, 0], sizes = [1, 32, 2048], strides = [1, 1, 1]} : vector<2x32x2048xbf16> to vector<1x32x2048xbf16>
    %99 = vector.shape_cast %98 : vector<1x32x2048xbf16> to vector<32x2048xbf16>
    %100 = arith.truncf %97 : vector<8x32xf32> to vector<8x32xbf16>
    %cst_40 = arith.constant dense<0.000000e+00> : vector<8x2048xf32>
    %101 = tpu.matmul %100, %99, %cst_40 {dimension_numbers = #tpu.dot_dimension_numbers<[1], [0], [0], [1], [0, 0, 1, 1], [], []>} : vector<8x32xbf16>, vector<32x2048xbf16>, vector<8x2048xf32> -> vector<8x2048xf32>
    %102 = vector.extract_strided_slice %5 {offsets = [0, 0, 0], sizes = [1, 1, 2048], strides = [1, 1, 1]} : vector<2x1x2048xf32> to vector<1x1x2048xf32>
    %103 = vector.shape_cast %102 : vector<1x1x2048xf32> to vector<1x2048xf32>
    %104 = vector.broadcast %103 : vector<1x2048xf32> to vector<8x2048xf32>
    %105 = arith.addf %101, %104 : vector<8x2048xf32>
    %cst_41 = arith.constant 0.000000e+00 : f32
    %106 = vector.broadcast %cst_41 : f32 to vector<8x2048xf32>
    %107 = arith.maximumf %105, %106 : vector<8x2048xf32>
    %108 = arith.truncf %107 : vector<8x2048xf32> to vector<8x2048xbf16>
    %109 = vector.extract_strided_slice %6 {offsets = [0, 0, 0], sizes = [1, 32, 2048], strides = [1, 1, 1]} : vector<2x32x2048xbf16> to vector<1x32x2048xbf16>
    %110 = vector.shape_cast %109 : vector<1x32x2048xbf16> to vector<32x2048xbf16>
    %cst_42 = arith.constant dense<0.000000e+00> : vector<8x32xf32>
    %111 = tpu.matmul %108, %110, %cst_42 {dimension_numbers = #tpu.dot_dimension_numbers<[1], [1], [0], [0], [0, 0, 1, 0], [], []>} : vector<8x2048xbf16>, vector<32x2048xbf16>, vector<8x32xf32> -> vector<8x32xf32>
    %112 = vector.extract_strided_slice %8 {offsets = [12, 0], sizes = [1, 32], strides = [1, 1]} : vector<22x32xf32> to vector<1x32xf32>
    %113 = vector.broadcast %112 : vector<1x32xf32> to vector<8x32xf32>
    %114 = arith.addf %111, %113 : vector<8x32xf32>
    %115 = arith.addf %97, %114 : vector<8x32xf32>
    %116 = vector.extract_strided_slice %8 {offsets = [10, 0], sizes = [1, 32], strides = [1, 1]} : vector<22x32xf32> to vector<1x32xf32>
    %117 = vector.extract_strided_slice %8 {offsets = [11, 0], sizes = [1, 32], strides = [1, 1]} : vector<22x32xf32> to vector<1x32xf32>
    %cst_43 = arith.constant dense<0.000000e+00> : vector<8xf32>
    %118 = vector.multi_reduction <add>, %115, %cst_43 [1] : vector<8x32xf32> to vector<8xf32>
    %119 = vector.shape_cast %118 : vector<8xf32> to vector<8x1xf32>
    %cst_44 = arith.constant 3.200000e+01 : f32
    %120 = vector.broadcast %cst_44 : f32 to vector<8x1xf32>
    %121 = arith.divf %119, %120 : vector<8x1xf32>
    %122 = vector.broadcast %121 : vector<8x1xf32> to vector<8x32xf32>
    %123 = arith.subf %115, %122 : vector<8x32xf32>
    %124 = arith.mulf %123, %123 : vector<8x32xf32>
    %cst_45 = arith.constant dense<0.000000e+00> : vector<8xf32>
    %125 = vector.multi_reduction <add>, %124, %cst_45 [1] : vector<8x32xf32> to vector<8xf32>
    %126 = vector.shape_cast %125 : vector<8xf32> to vector<8x1xf32>
    %cst_46 = arith.constant 3.200000e+01 : f32
    %127 = vector.broadcast %cst_46 : f32 to vector<8x1xf32>
    %128 = arith.divf %126, %127 : vector<8x1xf32>
    %129 = vector.broadcast %121 : vector<8x1xf32> to vector<8x32xf32>
    %130 = arith.subf %115, %129 : vector<8x32xf32>
    %cst_47 = arith.constant 9.99999974E-6 : f32
    %131 = vector.broadcast %cst_47 : f32 to vector<8x1xf32>
    %132 = arith.addf %128, %131 : vector<8x1xf32>
    %133 = math.rsqrt %132 : vector<8x1xf32>
    %134 = vector.broadcast %133 : vector<8x1xf32> to vector<8x32xf32>
    %135 = arith.mulf %130, %134 : vector<8x32xf32>
    %136 = vector.broadcast %116 : vector<1x32xf32> to vector<8x32xf32>
    %137 = arith.mulf %135, %136 : vector<8x32xf32>
    %138 = vector.broadcast %117 : vector<1x32xf32> to vector<8x32xf32>
    %139 = arith.addf %137, %138 : vector<8x32xf32>
    %140 = vector.extract_strided_slice %2 {offsets = [1, 0, 0], sizes = [1, 32, 96], strides = [1, 1, 1]} : vector<2x32x96xbf16> to vector<1x32x96xbf16>
    %141 = vector.shape_cast %140 : vector<1x32x96xbf16> to vector<32x96xbf16>
    %142 = arith.truncf %139 : vector<8x32xf32> to vector<8x32xbf16>
    %cst_48 = arith.constant dense<0.000000e+00> : vector<8x96xf32>
    %143 = tpu.matmul %142, %141, %cst_48 {dimension_numbers = #tpu.dot_dimension_numbers<[1], [0], [0], [1], [0, 0, 1, 1], [], []>} : vector<8x32xbf16>, vector<32x96xbf16>, vector<8x96xf32> -> vector<8x96xf32>
    %144 = vector.extract_strided_slice %143 {offsets = [0, 0], sizes = [8, 32], strides = [1, 1]} : vector<8x96xf32> to vector<8x32xf32>
    %145 = vector.extract_strided_slice %8 {offsets = [13, 0], sizes = [1, 32], strides = [1, 1]} : vector<22x32xf32> to vector<1x32xf32>
    %146 = vector.broadcast %145 : vector<1x32xf32> to vector<8x32xf32>
    %147 = arith.addf %144, %146 : vector<8x32xf32>
    %148 = vector.extract_strided_slice %143 {offsets = [0, 32], sizes = [8, 32], strides = [1, 1]} : vector<8x96xf32> to vector<8x32xf32>
    %149 = vector.extract_strided_slice %8 {offsets = [14, 0], sizes = [1, 32], strides = [1, 1]} : vector<22x32xf32> to vector<1x32xf32>
    %150 = vector.broadcast %149 : vector<1x32xf32> to vector<8x32xf32>
    %151 = arith.addf %148, %150 : vector<8x32xf32>
    %152 = vector.extract_strided_slice %143 {offsets = [0, 64], sizes = [8, 32], strides = [1, 1]} : vector<8x96xf32> to vector<8x32xf32>
    %153 = vector.extract_strided_slice %8 {offsets = [15, 0], sizes = [1, 32], strides = [1, 1]} : vector<22x32xf32> to vector<1x32xf32>
    %154 = vector.broadcast %153 : vector<1x32xf32> to vector<8x32xf32>
    %155 = arith.addf %152, %154 : vector<8x32xf32>
    %156 = vector.extract_strided_slice %147 {offsets = [0, 0], sizes = [8, 16], strides = [1, 1]} : vector<8x32xf32> to vector<8x16xf32>
    %cst_49 = arith.constant 2.500000e-01 : f32
    %157 = vector.broadcast %cst_49 : f32 to vector<8x16xf32>
    %158 = arith.mulf %156, %157 : vector<8x16xf32>
    %159 = vector.extract_strided_slice %151 {offsets = [0, 0], sizes = [8, 16], strides = [1, 1]} : vector<8x32xf32> to vector<8x16xf32>
    %160 = vector.extract_strided_slice %155 {offsets = [0, 0], sizes = [8, 16], strides = [1, 1]} : vector<8x32xf32> to vector<8x16xf32>
    %cst_50 = arith.constant dense<0.000000e+00> : vector<8x8xf32>
    %161 = tpu.matmul %158, %159, %cst_50 {dimension_numbers = #tpu.dot_dimension_numbers<[1], [1], [0], [0], [0, 0, 1, 0], [], []>} : vector<8x16xf32>, vector<8x16xf32>, vector<8x8xf32> -> vector<8x8xf32>
    %cst_51 = arith.constant dense<0xFF800000> : vector<8xf32>
    %162 = vector.multi_reduction <maximumf>, %161, %cst_51 [1] : vector<8x8xf32> to vector<8xf32>
    %163 = vector.shape_cast %162 : vector<8xf32> to vector<8x1xf32>
    %164 = vector.broadcast %163 : vector<8x1xf32> to vector<8x8xf32>
    %165 = arith.subf %161, %164 : vector<8x8xf32>
    %166 = math.exp %165 : vector<8x8xf32>
    %cst_52 = arith.constant dense<0.000000e+00> : vector<8xf32>
    %167 = vector.multi_reduction <add>, %166, %cst_52 [1] : vector<8x8xf32> to vector<8xf32>
    %168 = vector.shape_cast %167 : vector<8xf32> to vector<8x1xf32>
    %169 = tpu.reciprocal %168 {approx = true} : vector<8x1xf32> -> vector<8x1xf32>
    %170 = vector.broadcast %169 : vector<8x1xf32> to vector<8x8xf32>
    %171 = arith.mulf %166, %170 : vector<8x8xf32>
    %cst_53 = arith.constant dense<0.000000e+00> : vector<8x16xf32>
    %172 = tpu.matmul %171, %160, %cst_53 {dimension_numbers = #tpu.dot_dimension_numbers<[1], [0], [0], [1], [0, 0, 1, 1], [], []>} : vector<8x8xf32>, vector<8x16xf32>, vector<8x16xf32> -> vector<8x16xf32>
    %173 = vector.extract_strided_slice %147 {offsets = [0, 16], sizes = [8, 16], strides = [1, 1]} : vector<8x32xf32> to vector<8x16xf32>
    %cst_54 = arith.constant 2.500000e-01 : f32
    %174 = vector.broadcast %cst_54 : f32 to vector<8x16xf32>
    %175 = arith.mulf %173, %174 : vector<8x16xf32>
    %176 = vector.extract_strided_slice %151 {offsets = [0, 16], sizes = [8, 16], strides = [1, 1]} : vector<8x32xf32> to vector<8x16xf32>
    %177 = vector.extract_strided_slice %155 {offsets = [0, 16], sizes = [8, 16], strides = [1, 1]} : vector<8x32xf32> to vector<8x16xf32>
    %cst_55 = arith.constant dense<0.000000e+00> : vector<8x8xf32>
    %178 = tpu.matmul %175, %176, %cst_55 {dimension_numbers = #tpu.dot_dimension_numbers<[1], [1], [0], [0], [0, 0, 1, 0], [], []>} : vector<8x16xf32>, vector<8x16xf32>, vector<8x8xf32> -> vector<8x8xf32>
    %cst_56 = arith.constant dense<0xFF800000> : vector<8xf32>
    %179 = vector.multi_reduction <maximumf>, %178, %cst_56 [1] : vector<8x8xf32> to vector<8xf32>
    %180 = vector.shape_cast %179 : vector<8xf32> to vector<8x1xf32>
    %181 = vector.broadcast %180 : vector<8x1xf32> to vector<8x8xf32>
    %182 = arith.subf %178, %181 : vector<8x8xf32>
    %183 = math.exp %182 : vector<8x8xf32>
    %cst_57 = arith.constant dense<0.000000e+00> : vector<8xf32>
    %184 = vector.multi_reduction <add>, %183, %cst_57 [1] : vector<8x8xf32> to vector<8xf32>
    %185 = vector.shape_cast %184 : vector<8xf32> to vector<8x1xf32>
    %186 = tpu.reciprocal %185 {approx = true} : vector<8x1xf32> -> vector<8x1xf32>
    %187 = vector.broadcast %186 : vector<8x1xf32> to vector<8x8xf32>
    %188 = arith.mulf %183, %187 : vector<8x8xf32>
    %cst_58 = arith.constant dense<0.000000e+00> : vector<8x16xf32>
    %189 = tpu.matmul %188, %177, %cst_58 {dimension_numbers = #tpu.dot_dimension_numbers<[1], [0], [0], [1], [0, 0, 1, 1], [], []>} : vector<8x8xf32>, vector<8x16xf32>, vector<8x16xf32> -> vector<8x16xf32>
    %190 = tpu.concatenate %172, %189 in 1 : vector<8x16xf32>, vector<8x16xf32> -> vector<8x32xf32>
    %191 = vector.extract_strided_slice %3 {offsets = [1, 0, 0], sizes = [1, 32, 32], strides = [1, 1, 1]} : vector<2x32x32xbf16> to vector<1x32x32xbf16>
    %192 = vector.shape_cast %191 : vector<1x32x32xbf16> to vector<32x32xbf16>
    %193 = arith.truncf %190 : vector<8x32xf32> to vector<8x32xbf16>
    %cst_59 = arith.constant dense<0.000000e+00> : vector<8x32xf32>
    %194 = tpu.matmul %193, %192, %cst_59 {dimension_numbers = #tpu.dot_dimension_numbers<[1], [0], [0], [1], [0, 0, 1, 1], [], []>} : vector<8x32xbf16>, vector<32x32xbf16>, vector<8x32xf32> -> vector<8x32xf32>
    %195 = vector.extract_strided_slice %8 {offsets = [16, 0], sizes = [1, 32], strides = [1, 1]} : vector<22x32xf32> to vector<1x32xf32>
    %196 = vector.broadcast %195 : vector<1x32xf32> to vector<8x32xf32>
    %197 = arith.addf %194, %196 : vector<8x32xf32>
    %198 = arith.addf %139, %197 : vector<8x32xf32>
    %199 = vector.extract_strided_slice %8 {offsets = [17, 0], sizes = [1, 32], strides = [1, 1]} : vector<22x32xf32> to vector<1x32xf32>
    %200 = vector.extract_strided_slice %8 {offsets = [18, 0], sizes = [1, 32], strides = [1, 1]} : vector<22x32xf32> to vector<1x32xf32>
    %cst_60 = arith.constant dense<0.000000e+00> : vector<8xf32>
    %201 = vector.multi_reduction <add>, %198, %cst_60 [1] : vector<8x32xf32> to vector<8xf32>
    %202 = vector.shape_cast %201 : vector<8xf32> to vector<8x1xf32>
    %cst_61 = arith.constant 3.200000e+01 : f32
    %203 = vector.broadcast %cst_61 : f32 to vector<8x1xf32>
    %204 = arith.divf %202, %203 : vector<8x1xf32>
    %205 = vector.broadcast %204 : vector<8x1xf32> to vector<8x32xf32>
    %206 = arith.subf %198, %205 : vector<8x32xf32>
    %207 = arith.mulf %206, %206 : vector<8x32xf32>
    %cst_62 = arith.constant dense<0.000000e+00> : vector<8xf32>
    %208 = vector.multi_reduction <add>, %207, %cst_62 [1] : vector<8x32xf32> to vector<8xf32>
    %209 = vector.shape_cast %208 : vector<8xf32> to vector<8x1xf32>
    %cst_63 = arith.constant 3.200000e+01 : f32
    %210 = vector.broadcast %cst_63 : f32 to vector<8x1xf32>
    %211 = arith.divf %209, %210 : vector<8x1xf32>
    %212 = vector.broadcast %204 : vector<8x1xf32> to vector<8x32xf32>
    %213 = arith.subf %198, %212 : vector<8x32xf32>
    %cst_64 = arith.constant 9.99999974E-6 : f32
    %214 = vector.broadcast %cst_64 : f32 to vector<8x1xf32>
    %215 = arith.addf %211, %214 : vector<8x1xf32>
    %216 = math.rsqrt %215 : vector<8x1xf32>
    %217 = vector.broadcast %216 : vector<8x1xf32> to vector<8x32xf32>
    %218 = arith.mulf %213, %217 : vector<8x32xf32>
    %219 = vector.broadcast %199 : vector<1x32xf32> to vector<8x32xf32>
    %220 = arith.mulf %218, %219 : vector<8x32xf32>
    %221 = vector.broadcast %200 : vector<1x32xf32> to vector<8x32xf32>
    %222 = arith.addf %220, %221 : vector<8x32xf32>
    %223 = vector.extract_strided_slice %4 {offsets = [1, 0, 0], sizes = [1, 32, 2048], strides = [1, 1, 1]} : vector<2x32x2048xbf16> to vector<1x32x2048xbf16>
    %224 = vector.shape_cast %223 : vector<1x32x2048xbf16> to vector<32x2048xbf16>
    %225 = arith.truncf %222 : vector<8x32xf32> to vector<8x32xbf16>
    %cst_65 = arith.constant dense<0.000000e+00> : vector<8x2048xf32>
    %226 = tpu.matmul %225, %224, %cst_65 {dimension_numbers = #tpu.dot_dimension_numbers<[1], [0], [0], [1], [0, 0, 1, 1], [], []>} : vector<8x32xbf16>, vector<32x2048xbf16>, vector<8x2048xf32> -> vector<8x2048xf32>
    %227 = vector.extract_strided_slice %5 {offsets = [1, 0, 0], sizes = [1, 1, 2048], strides = [1, 1, 1]} : vector<2x1x2048xf32> to vector<1x1x2048xf32>
    %228 = vector.shape_cast %227 : vector<1x1x2048xf32> to vector<1x2048xf32>
    %229 = vector.broadcast %228 : vector<1x2048xf32> to vector<8x2048xf32>
    %230 = arith.addf %226, %229 : vector<8x2048xf32>
    %cst_66 = arith.constant 0.000000e+00 : f32
    %231 = vector.broadcast %cst_66 : f32 to vector<8x2048xf32>
    %232 = arith.maximumf %230, %231 : vector<8x2048xf32>
    %233 = arith.truncf %232 : vector<8x2048xf32> to vector<8x2048xbf16>
    %234 = vector.extract_strided_slice %6 {offsets = [1, 0, 0], sizes = [1, 32, 2048], strides = [1, 1, 1]} : vector<2x32x2048xbf16> to vector<1x32x2048xbf16>
    %235 = vector.shape_cast %234 : vector<1x32x2048xbf16> to vector<32x2048xbf16>
    %cst_67 = arith.constant dense<0.000000e+00> : vector<8x32xf32>
    %236 = tpu.matmul %233, %235, %cst_67 {dimension_numbers = #tpu.dot_dimension_numbers<[1], [1], [0], [0], [0, 0, 1, 0], [], []>} : vector<8x2048xbf16>, vector<32x2048xbf16>, vector<8x32xf32> -> vector<8x32xf32>
    %237 = vector.extract_strided_slice %8 {offsets = [21, 0], sizes = [1, 32], strides = [1, 1]} : vector<22x32xf32> to vector<1x32xf32>
    %238 = vector.broadcast %237 : vector<1x32xf32> to vector<8x32xf32>
    %239 = arith.addf %236, %238 : vector<8x32xf32>
    %240 = arith.addf %222, %239 : vector<8x32xf32>
    %241 = vector.extract_strided_slice %8 {offsets = [19, 0], sizes = [1, 32], strides = [1, 1]} : vector<22x32xf32> to vector<1x32xf32>
    %242 = vector.extract_strided_slice %8 {offsets = [20, 0], sizes = [1, 32], strides = [1, 1]} : vector<22x32xf32> to vector<1x32xf32>
    %cst_68 = arith.constant dense<0.000000e+00> : vector<8xf32>
    %243 = vector.multi_reduction <add>, %240, %cst_68 [1] : vector<8x32xf32> to vector<8xf32>
    %244 = vector.shape_cast %243 : vector<8xf32> to vector<8x1xf32>
    %cst_69 = arith.constant 3.200000e+01 : f32
    %245 = vector.broadcast %cst_69 : f32 to vector<8x1xf32>
    %246 = arith.divf %244, %245 : vector<8x1xf32>
    %247 = vector.broadcast %246 : vector<8x1xf32> to vector<8x32xf32>
    %248 = arith.subf %240, %247 : vector<8x32xf32>
    %249 = arith.mulf %248, %248 : vector<8x32xf32>
    %cst_70 = arith.constant dense<0.000000e+00> : vector<8xf32>
    %250 = vector.multi_reduction <add>, %249, %cst_70 [1] : vector<8x32xf32> to vector<8xf32>
    %251 = vector.shape_cast %250 : vector<8xf32> to vector<8x1xf32>
    %cst_71 = arith.constant 3.200000e+01 : f32
    %252 = vector.broadcast %cst_71 : f32 to vector<8x1xf32>
    %253 = arith.divf %251, %252 : vector<8x1xf32>
    %254 = vector.broadcast %246 : vector<8x1xf32> to vector<8x32xf32>
    %255 = arith.subf %240, %254 : vector<8x32xf32>
    %cst_72 = arith.constant 9.99999974E-6 : f32
    %256 = vector.broadcast %cst_72 : f32 to vector<8x1xf32>
    %257 = arith.addf %253, %256 : vector<8x1xf32>
    %258 = math.rsqrt %257 : vector<8x1xf32>
    %259 = vector.broadcast %258 : vector<8x1xf32> to vector<8x32xf32>
    %260 = arith.mulf %255, %259 : vector<8x32xf32>
    %261 = vector.broadcast %241 : vector<1x32xf32> to vector<8x32xf32>
    %262 = arith.mulf %260, %261 : vector<8x32xf32>
    %263 = vector.broadcast %242 : vector<1x32xf32> to vector<8x32xf32>
    %264 = arith.addf %262, %263 : vector<8x32xf32>
    %265 = vector.extract_strided_slice %8 {offsets = [1, 0], sizes = [1, 32], strides = [1, 1]} : vector<22x32xf32> to vector<1x32xf32>
    %266 = vector.extract_strided_slice %8 {offsets = [2, 0], sizes = [1, 32], strides = [1, 1]} : vector<22x32xf32> to vector<1x32xf32>
    %cst_73 = arith.constant dense<0.000000e+00> : vector<8xf32>
    %267 = vector.multi_reduction <add>, %264, %cst_73 [1] : vector<8x32xf32> to vector<8xf32>
    %268 = vector.shape_cast %267 : vector<8xf32> to vector<8x1xf32>
    %cst_74 = arith.constant 3.200000e+01 : f32
    %269 = vector.broadcast %cst_74 : f32 to vector<8x1xf32>
    %270 = arith.divf %268, %269 : vector<8x1xf32>
    %271 = vector.broadcast %270 : vector<8x1xf32> to vector<8x32xf32>
    %272 = arith.subf %264, %271 : vector<8x32xf32>
    %273 = arith.mulf %272, %272 : vector<8x32xf32>
    %cst_75 = arith.constant dense<0.000000e+00> : vector<8xf32>
    %274 = vector.multi_reduction <add>, %273, %cst_75 [1] : vector<8x32xf32> to vector<8xf32>
    %275 = vector.shape_cast %274 : vector<8xf32> to vector<8x1xf32>
    %cst_76 = arith.constant 3.200000e+01 : f32
    %276 = vector.broadcast %cst_76 : f32 to vector<8x1xf32>
    %277 = arith.divf %275, %276 : vector<8x1xf32>
    %278 = vector.broadcast %270 : vector<8x1xf32> to vector<8x32xf32>
    %279 = arith.subf %264, %278 : vector<8x32xf32>
    %cst_77 = arith.constant 9.99999974E-6 : f32
    %280 = vector.broadcast %cst_77 : f32 to vector<8x1xf32>
    %281 = arith.addf %277, %280 : vector<8x1xf32>
    %282 = math.rsqrt %281 : vector<8x1xf32>
    %283 = vector.broadcast %282 : vector<8x1xf32> to vector<8x32xf32>
    %284 = arith.mulf %279, %283 : vector<8x32xf32>
    %285 = vector.broadcast %265 : vector<1x32xf32> to vector<8x32xf32>
    %286 = arith.mulf %284, %285 : vector<8x32xf32>
    %287 = vector.broadcast %266 : vector<1x32xf32> to vector<8x32xf32>
    %288 = arith.addf %286, %287 : vector<8x32xf32>
    %cst_78 = arith.constant dense<0.000000e+00> : vector<8x8xf32>
    %289 = tpu.matmul %288, %7, %cst_78 {dimension_numbers = #tpu.dot_dimension_numbers<[1], [0], [0], [1], [0, 0, 1, 1], [], []>} : vector<8x32xf32>, vector<32x8xf32>, vector<8x8xf32> -> vector<8x8xf32>
    %290 = vector.extract_strided_slice %8 {offsets = [3, 0], sizes = [1, 32], strides = [1, 1]} : vector<22x32xf32> to vector<1x32xf32>
    %291 = vector.extract_strided_slice %290 {offsets = [0, 0], sizes = [1, 8], strides = [1, 1]} : vector<1x32xf32> to vector<1x8xf32>
    %292 = vector.broadcast %291 : vector<1x8xf32> to vector<8x8xf32>
    %293 = arith.addf %289, %292 : vector<8x8xf32>
    %cst_79 = arith.constant 0.000000e+00 : f32
    %294 = vector.broadcast %cst_79 : f32 to vector<8x8xf32>
    %295 = arith.subf %294, %293 : vector<8x8xf32>
    %296 = math.exp %295 : vector<8x8xf32>
    %cst_80 = arith.constant 1.000000e+00 : f32
    %297 = vector.broadcast %cst_80 : f32 to vector<8x8xf32>
    %298 = arith.addf %297, %296 : vector<8x8xf32>
    %299 = tpu.reciprocal %298 {approx = true} : vector<8x8xf32> -> vector<8x8xf32>
    %c0_81 = arith.constant 0 : index
    %c0_82 = arith.constant 0 : index
    %300 = vector.load %arg9[%c0_81, %c0_82] : memref<8x8xf32, #tpu.memory_space<vmem>>, vector<8x8xf32>
    tpu.vector_store %arg9[%c0_81, %c0_82], %299 {strides = array<i32>} : memref<8x8xf32, #tpu.memory_space<vmem>>, vector<8x8xf32>,
    return
  }
}

</mosaic_0001>

<llo_original>
// kernel: tpu_custom_call.1
$region0: #{tpu_custom_call.1}
  #allocation0 [shape = 'u32[]', space=smem, size = 0x4, offset = 0x4, fixed_abs, tag = 'smem constant byte address 0x4 - core index']
  #allocation1 [shape = 'u32[72,128]{1,0:T(1,128)}', space=vmem, size = 0x9000, scoped, tag = 'internal scratch']
  %s0 = inlined_call_operand.vmem [shape: f32[8,16], index: 0, kind: input, shape index: {}]
  %s1 = inlined_call_operand.hbm [shape: f32[16,32], index: 1, kind: input, shape index: {}]
  %s2 = inlined_call_operand.vmem [shape: bf16[2,32,96], index: 2, kind: input, shape index: {}]
  %s3 = inlined_call_operand.hbm [shape: bf16[2,32,32], index: 3, kind: input, shape index: {}]
  %s4 = inlined_call_operand.hbm [shape: bf16[2,32,2048], index: 4, kind: input, shape index: {}]
  %s5 = inlined_call_operand.hbm [shape: f32[2,1,2048], index: 5, kind: input, shape index: {}]
  %s6 = inlined_call_operand.hbm [shape: bf16[2,32,2048], index: 6, kind: input, shape index: {}]
  %s7 = inlined_call_operand.vmem [shape: f32[32,8], index: 7, kind: input, shape index: {}]
  %s8 = inlined_call_operand.hbm [shape: f32[22,32], index: 8, kind: input, shape index: {}]
  %s9 = inlined_call_operand.hbm [shape: f32[8,8], index: 9, kind: output, shape index: {}]
  %s10 = sld [smem:[#allocation0]]
  $region70: #{tpu_custom_call.1} parent=0
    _
  %s12 = ssub.s32 1, %s10
  %s13 = scalar_select 0, %s12, %s10
  $region1: #{tpu_custom_call.1} parent=0
    #allocation2 [shape = 'u8[8192]{0}', space=vmem, size = 0x2000, scoped, tag = 'input window, operand 1, single buffered']
    #allocation3 [shape = 's32[1]{0}', space=sflag, size = 0x4, scoped, tag = 'scoped memory for tpu_custom_call.1']
    #allocation4 [shape = 's32[1]{0}', space=sflag, size = 0x4, scoped, tag = 'scoped memory for tpu_custom_call.1']
    #allocation5 [shape = 'u8[16384]{0}', space=vmem, size = 0x4000, scoped, tag = 'input window, operand 3, single buffered']
    #allocation6 [shape = 's32[1]{0}', space=sflag, size = 0x4, scoped, tag = 'scoped memory for tpu_custom_call.1']
    #allocation7 [shape = 'u8[262144]{0}', space=vmem, size = 0x40000, scoped, tag = 'input window, operand 4, single buffered']
    #allocation8 [shape = 'u8[16384]{0}', space=vmem, size = 0x4000, scoped, tag = 'input window, operand 5, single buffered']
    #allocation9 [shape = 's32[1]{0}', space=sflag, size = 0x4, scoped, tag = 'scoped memory for tpu_custom_call.1']
    #allocation10 [shape = 'u8[262144]{0}', space=vmem, size = 0x40000, scoped, tag = 'input window, operand 6, single buffered']
    #allocation11 [shape = 'u8[12288]{0}', space=vmem, size = 0x3000, scoped, tag = 'input window, operand 8, single buffered']
    #allocation12 [shape = 's32[1]{0}', space=sflag, size = 0x4, scoped, tag = 'scoped memory for tpu_custom_call.1']
    #allocation13 [shape = 'u8[4096]{0}', space=vmem, size = 0x1000, scoped, tag = 'output window, operand 0, single buffered']
    %14 = vsyncpa [#allocation3], 0
    %15 = vsyncpa [#allocation6], 0
    %16 = vsyncpa [#allocation9], 0
    %17 = vsyncpa [#allocation12], 0
    %18 = vsyncpa [#allocation4], 0
    // Predicated region
    $region2: #{tpu_custom_call.1} parent=1 // pred_check
      _
    $region3: #{tpu_custom_call.1} parent=1 // pred_check_branch
      %20 = sbr.rel (0) target = $region5
    $region4: #{tpu_custom_call.1} parent=1 // pred_region
      _
    $region5: #{tpu_custom_call.1} parent=1 // pred_fallthru
      _
    // Predicated region
    $region6: #{tpu_custom_call.1} parent=1 // pred_check
      _
    $region7: #{tpu_custom_call.1} parent=1 // pred_check_branch
      %22 = sbr.rel (0) target = $region9
    $region8: #{tpu_custom_call.1} parent=1 // pred_region
      %24 = vsyncadd [#allocation3], 0
      %s25 = sshll.u32 %s1, 4
      %s26 = int_to_ptr.hbm [resolvable:$true] %s25
      %s27 = sshll.u32 [#allocation2], 4
      %s28 = int_to_ptr.vmem [resolvable:$true] %s27
      %33 = dma.hbm_to_vmem [thread:$0]  %s26, 256, %s28, [#allocation3], 128, 128, 8
    $region9: #{tpu_custom_call.1} parent=1 // pred_fallthru
      _
    // Predicated region
    $region10: #{tpu_custom_call.1} parent=1 // pred_check
      _
    $region11: #{tpu_custom_call.1} parent=1 // pred_check_branch
      %35 = sbr.rel (0) target = $region13
    $region12: #{tpu_custom_call.1} parent=1 // pred_region
      _
    $region13: #{tpu_custom_call.1} parent=1 // pred_fallthru
      _
    // Predicated region
    $region14: #{tpu_custom_call.1} parent=1 // pred_check
      _
    $region15: #{tpu_custom_call.1} parent=1 // pred_check_branch
      %37 = sbr.rel (0) target = $region17
    $region16: #{tpu_custom_call.1} parent=1 // pred_region
      %39 = vsyncadd [#allocation6], 0
      %s40 = sshll.u32 %s3, 4
      %s41 = int_to_ptr.hbm [resolvable:$true] %s40
      %s42 = sshll.u32 [#allocation5], 4
      %s43 = int_to_ptr.vmem [resolvable:$true] %s42
      %48 = dma.hbm_to_vmem [thread:$0]  %s41, 512, %s43, [#allocation6], 64, 64, 4
    $region17: #{tpu_custom_call.1} parent=1 // pred_fallthru
      _
    // Predicated region
    $region18: #{tpu_custom_call.1} parent=1 // pred_check
      _
    $region19: #{tpu_custom_call.1} parent=1 // pred_check_branch
      %50 = sbr.rel (0) target = $region21
    $region20: #{tpu_custom_call.1} parent=1 // pred_region
      %52 = vsyncadd [#allocation6], 0
      %s53 = sshll.u32 %s4, 4
      %s54 = int_to_ptr.hbm [resolvable:$true] %s53
      %s55 = sshll.u32 [#allocation7], 4
      %s56 = int_to_ptr.vmem [resolvable:$true] %s55
      %61 = dma.hbm_to_vmem [thread:$0]  %s54, 8192, %s56, [#allocation6], 1024, 1024, 64
    $region21: #{tpu_custom_call.1} parent=1 // pred_fallthru
      _
    // Predicated region
    $region22: #{tpu_custom_call.1} parent=1 // pred_check
      _
    $region23: #{tpu_custom_call.1} parent=1 // pred_check_branch
      %63 = sbr.rel (0) target = $region25
    $region24: #{tpu_custom_call.1} parent=1 // pred_region
      %65 = vsyncadd [#allocation9], 0
      %s66 = sshll.u32 %s5, 4
      %s67 = int_to_ptr.hbm [resolvable:$true] %s66
      %s68 = sshll.u32 [#allocation8], 4
      %s69 = int_to_ptr.vmem [resolvable:$true] %s68
      %74 = dma.hbm_to_vmem [thread:$0]  %s67, 512, %s69, [#allocation9], 256, 256, 16
    $region25: #{tpu_custom_call.1} parent=1 // pred_fallthru
      _
    // Predicated region
    $region26: #{tpu_custom_call.1} parent=1 // pred_check
      _
    $region27: #{tpu_custom_call.1} parent=1 // pred_check_branch
      %76 = sbr.rel (0) target = $region29
    $region28: #{tpu_custom_call.1} parent=1 // pred_region
      %78 = vsyncadd [#allocation9], 0
      %s79 = sshll.u32 %s6, 4
      %s80 = int_to_ptr.hbm [resolvable:$true] %s79
      %s81 = sshll.u32 [#allocation10], 4
      %s82 = int_to_ptr.vmem [resolvable:$true] %s81
      %87 = dma.hbm_to_vmem [thread:$0]  %s80, 8192, %s82, [#allocation9], 1024, 1024, 64
    $region29: #{tpu_custom_call.1} parent=1 // pred_fallthru
      _
    // Predicated region
    $region30: #{tpu_custom_call.1} parent=1 // pred_check
      _
    $region31: #{tpu_custom_call.1} parent=1 // pred_check_branch
      %89 = sbr.rel (0) target = $region33
    $region32: #{tpu_custom_call.1} parent=1 // pred_region
      _
    $region33: #{tpu_custom_call.1} parent=1 // pred_fallthru
      _
    // Predicated region
    $region34: #{tpu_custom_call.1} parent=1 // pred_check
      _
    $region35: #{tpu_custom_call.1} parent=1 // pred_check_branch
      %91 = sbr.rel (0) target = $region37
    $region36: #{tpu_custom_call.1} parent=1 // pred_region
      %93 = vsyncadd [#allocation12], 0
      %s94 = sshll.u32 %s8, 4
      %s95 = int_to_ptr.hbm [resolvable:$true] %s94
      %s96 = sshll.u32 [#allocation11], 4
      %s97 = int_to_ptr.vmem [resolvable:$true] %s96
      %102 = dma.hbm_to_vmem [thread:$0]  %s95, 384, %s97, [#allocation12], 128, 128, 8
    $region37: #{tpu_custom_call.1} parent=1 // pred_fallthru
      _
    // Predicated region
    $region38: #{tpu_custom_call.1} parent=1 // pred_check
      _
    $region39: #{tpu_custom_call.1} parent=1 // pred_check_branch
      %104 = sbr.rel (0) target = $region41
    $region40: #{tpu_custom_call.1} parent=1 // pred_region
      %106 = dma.done [#allocation3], 256
    $region41: #{tpu_custom_call.1} parent=1 // pred_fallthru
      _
    // Predicated region
    $region42: #{tpu_custom_call.1} parent=1 // pred_check
      _
    $region43: #{tpu_custom_call.1} parent=1 // pred_check_branch
      %108 = sbr.rel (0) target = $region45
    $region44: #{tpu_custom_call.1} parent=1 // pred_region
      %110 = dma.done [#allocation6], 512
    $region45: #{tpu_custom_call.1} parent=1 // pred_fallthru
      _
    // Predicated region
    $region46: #{tpu_custom_call.1} parent=1 // pred_check
      _
    $region47: #{tpu_custom_call.1} parent=1 // pred_check_branch
      %112 = sbr.rel (0) target = $region49
    $region48: #{tpu_custom_call.1} parent=1 // pred_region
      %114 = dma.done [#allocation6], 8192
    $region49: #{tpu_custom_call.1} parent=1 // pred_fallthru
      _
    // Predicated region
    $region50: #{tpu_custom_call.1} parent=1 // pred_check
      _
    $region51: #{tpu_custom_call.1} parent=1 // pred_check_branch
      %116 = sbr.rel (0) target = $region53
    $region52: #{tpu_custom_call.1} parent=1 // pred_region
      %118 = dma.done [#allocation9], 512
    $region53: #{tpu_custom_call.1} parent=1 // pred_fallthru
      _
    // Predicated region
    $region54: #{tpu_custom_call.1} parent=1 // pred_check
      _
    $region55: #{tpu_custom_call.1} parent=1 // pred_check_branch
      %120 = sbr.rel (0) target = $region57
    $region56: #{tpu_custom_call.1} parent=1 // pred_region
      %122 = dma.done [#allocation9], 8192
    $region57: #{tpu_custom_call.1} parent=1 // pred_fallthru
      _
    // Predicated region
    $region58: #{tpu_custom_call.1} parent=1 // pred_check
      _
    $region59: #{tpu_custom_call.1} parent=1 // pred_check_branch
      %124 = sbr.rel (0) target = $region61
    $region60: #{tpu_custom_call.1} parent=1 // pred_region
      %126 = dma.done [#allocation12], 384
    $region61: #{tpu_custom_call.1} parent=1 // pred_fallthru
      _
    %v128 = vld [vmem:[%s0] sm:$0xff]
    %v129 = vld [vmem:[#allocation2] sm:$0xff]
    %v130 = vld [vmem:[#allocation2 + $0x8] sm:$0xff]
    %v131 = vld [vmem:[%s2] sm:$0xf]
    %v132 = vld [vmem:[%s2 + $0x4] sm:$0xf]
    %v133 = vld [vmem:[%s2 + $0x8] sm:$0xf]
    %v134 = vld [vmem:[%s2 + $0xc] sm:$0xf]
    %v135 = vld [vmem:[%s2 + $0x10] sm:$0xf]
    %v136 = vld [vmem:[%s2 + $0x14] sm:$0xf]
    %v137 = vld [vmem:[%s2 + $0x18] sm:$0xf]
    %v138 = vld [vmem:[%s2 + $0x1c] sm:$0xf]
    %v139 = vld [vmem:[#allocation5] sm:$0xf]
    %v140 = vld [vmem:[#allocation5 + $0x4] sm:$0xf]
    %v141 = vld [vmem:[#allocation5 + $0x8] sm:$0xf]
    %v142 = vld [vmem:[#allocation5 + $0xc] sm:$0xf]
    %v143 = vld [vmem:[#allocation5 + $0x10] sm:$0xf]
    %v144 = vld [vmem:[#allocation5 + $0x14] sm:$0xf]
    %v145 = vld [vmem:[#allocation5 + $0x18] sm:$0xf]
    %v146 = vld [vmem:[#allocation5 + $0x1c] sm:$0xf]
    %v147 = vld [vmem:[#allocation7] sm:$0xff]
    %v148 = vld [vmem:[#allocation7 + $0x8] sm:$0xff]
    %v149 = vld [vmem:[#allocation7 + $0x10] sm:$0xff]
    %v150 = vld [vmem:[#allocation7 + $0x18] sm:$0xff]
    %v151 = vld [vmem:[#allocation7 + $0x20] sm:$0xff]
    %v152 = vld [vmem:[#allocation7 + $0x28] sm:$0xff]
    %v153 = vld [vmem:[#allocation7 + $0x30] sm:$0xff]
    %v154 = vld [vmem:[#allocation7 + $0x38] sm:$0xff]
    %v155 = vld [vmem:[#allocation7 + $0x40] sm:$0xff]
    %v156 = vld [vmem:[#allocation7 + $0x48] sm:$0xff]
    %v157 = vld [vmem:[#allocation7 + $0x50] sm:$0xff]
    %v158 = vld [vmem:[#allocation7 + $0x58] sm:$0xff]
    %v159 = vld [vmem:[#allocation7 + $0x60] sm:$0xff]
    %v160 = vld [vmem:[#allocation7 + $0x68] sm:$0xff]
    %v161 = vld [vmem:[#allocation7 + $0x70] sm:$0xff]
    %v162 = vld [vmem:[#allocation7 + $0x78] sm:$0xff]
    %v163 = vld [vmem:[#allocation7 + $0x80] sm:$0xff]
    %v164 = vld [vmem:[#allocation7 + $0x88] sm:$0xff]
    %v165 = vld [vmem:[#allocation7 + $0x90] sm:$0xff]
    %v166 = vld [vmem:[#allocation7 + $0x98] sm:$0xff]
    %v167 = vld [vmem:[#allocation7 + $0xa0] sm:$0xff]
    %v168 = vld [vmem:[#allocation7 + $0xa8] sm:$0xff]
    %v169 = vld [vmem:[#allocation7 + $0xb0] sm:$0xff]
    %v170 = vld [vmem:[#allocation7 + $0xb8] sm:$0xff]
    %v171 = vld [vmem:[#allocation7 + $0xc0] sm:$0xff]
    %v172 = vld [vmem:[#allocation7 + $0xc8] sm:$0xff]
    %v173 = vld [vmem:[#allocation7 + $0xd0] sm:$0xff]
    %v174 = vld [vmem:[#allocation7 + $0xd8] sm:$0xff]
    %v175 = vld [vmem:[#allocation7 + $0xe0] sm:$0xff]
    %v176 = vld [vmem:[#allocation7 + $0xe8] sm:$0xff]
    %v177 = vld [vmem:[#allocation7 + $0xf0] sm:$0xff]
    %v178 = vld [vmem:[#allocation7 + $0xf8] sm:$0xff]
    %v179 = vld [vmem:[#allocation7 + $0x100] sm:$0xff]
    %v180 = vld [vmem:[#allocation7 + $0x108] sm:$0xff]
    %v181 = vld [vmem:[#allocation7 + $0x110] sm:$0xff]
    %v182 = vld [vmem:[#allocation7 + $0x118] sm:$0xff]
    %v183 = vld [vmem:[#allocation7 + $0x120] sm:$0xff]
    %v184 = vld [vmem:[#allocation7 + $0x128] sm:$0xff]
    %v185 = vld [vmem:[#allocation7 + $0x130] sm:$0xff]
    %v186 = vld [vmem:[#allocation7 + $0x138] sm:$0xff]
    %v187 = vld [vmem:[#allocation7 + $0x140] sm:$0xff]
    %v188 = vld [vmem:[#allocation7 + $0x148] sm:$0xff]
    %v189 = vld [vmem:[#allocation7 + $0x150] sm:$0xff]
    %v190 = vld [vmem:[#allocation7 + $0x158] sm:$0xff]
    %v191 = vld [vmem:[#allocation7 + $0x160] sm:$0xff]
    %v192 = vld [vmem:[#allocation7 + $0x168] sm:$0xff]
    %v193 = vld [vmem:[#allocation7 + $0x170] sm:$0xff]
    %v194 = vld [vmem:[#allocation7 + $0x178] sm:$0xff]
    %v195 = vld [vmem:[#allocation7 + $0x180] sm:$0xff]
    %v196 = vld [vmem:[#allocation7 + $0x188] sm:$0xff]
    %v197 = vld [vmem:[#allocation7 + $0x190] sm:$0xff]
    %v198 = vld [vmem:[#allocation7 + $0x198] sm:$0xff]
    %v199 = vld [vmem:[#allocation7 + $0x1a0] sm:$0xff]
    %v200 = vld [vmem:[#allocation7 + $0x1a8] sm:$0xff]
    %v201 = vld [vmem:[#allocation7 + $0x1b0] sm:$0xff]
    %v202 = vld [vmem:[#allocation7 + $0x1b8] sm:$0xff]
    %v203 = vld [vmem:[#allocation7 + $0x1c0] sm:$0xff]
    %v204 = vld [vmem:[#allocation7 + $0x1c8] sm:$0xff]
    %v205 = vld [vmem:[#allocation7 + $0x1d0] sm:$0xff]
    %v206 = vld [vmem:[#allocation7 + $0x1d8] sm:$0xff]
    %v207 = vld [vmem:[#allocation7 + $0x1e0] sm:$0xff]
    %v208 = vld [vmem:[#allocation7 + $0x1e8] sm:$0xff]
    %v209 = vld [vmem:[#allocation7 + $0x1f0] sm:$0xff]
    %v210 = vld [vmem:[#allocation7 + $0x1f8] sm:$0xff]
    %v211 = vld [vmem:[#allocation8] sm:$0xff]
    %v212 = vld [vmem:[#allocation8 + $0x8] sm:$0xff]
    %v213 = vld [vmem:[#allocation8 + $0x10] sm:$0xff]
    %v214 = vld [vmem:[#allocation8 + $0x18] sm:$0xff]
    %v215 = vld [vmem:[#allocation10] sm:$0xff]
    %v216 = vld [vmem:[#allocation10 + $0x8] sm:$0xff]
    %v217 = vld [vmem:[#allocation10 + $0x10] sm:$0xff]
    %v218 = vld [vmem:[#allocation10 + $0x18] sm:$0xff]
    %v219 = vld [vmem:[#allocation10 + $0x20] sm:$0xff]
    %v220 = vld [vmem:[#allocation10 + $0x28] sm:$0xff]
    %v221 = vld [vmem:[#allocation10 + $0x30] sm:$0xff]
    %v222 = vld [vmem:[#allocation10 + $0x38] sm:$0xff]
    %v223 = vld [vmem:[#allocation10 + $0x40] sm:$0xff]
    %v224 = vld [vmem:[#allocation10 + $0x48] sm:$0xff]
    %v225 = vld [vmem:[#allocation10 + $0x50] sm:$0xff]
    %v226 = vld [vmem:[#allocation10 + $0x58] sm:$0xff]
    %v227 = vld [vmem:[#allocation10 + $0x60] sm:$0xff]
    %v228 = vld [vmem:[#allocation10 + $0x68] sm:$0xff]
    %v229 = vld [vmem:[#allocation10 + $0x70] sm:$0xff]
    %v230 = vld [vmem:[#allocation10 + $0x78] sm:$0xff]
    %v231 = vld [vmem:[#allocation10 + $0x80] sm:$0xff]
    %v232 = vld [vmem:[#allocation10 + $0x88] sm:$0xff]
    %v233 = vld [vmem:[#allocation10 + $0x90] sm:$0xff]
    %v234 = vld [vmem:[#allocation10 + $0x98] sm:$0xff]
    %v235 = vld [vmem:[#allocation10 + $0xa0] sm:$0xff]
    %v236 = vld [vmem:[#allocation10 + $0xa8] sm:$0xff]
    %v237 = vld [vmem:[#allocation10 + $0xb0] sm:$0xff]
    %v238 = vld [vmem:[#allocation10 + $0xb8] sm:$0xff]
    %v239 = vld [vmem:[#allocation10 + $0xc0] sm:$0xff]
    %v240 = vld [vmem:[#allocation10 + $0xc8] sm:$0xff]
    %v241 = vld [vmem:[#allocation10 + $0xd0] sm:$0xff]
    %v242 = vld [vmem:[#allocation10 + $0xd8] sm:$0xff]
    %v243 = vld [vmem:[#allocation10 + $0xe0] sm:$0xff]
    %v244 = vld [vmem:[#allocation10 + $0xe8] sm:$0xff]
    %v245 = vld [vmem:[#allocation10 + $0xf0] sm:$0xff]
    %v246 = vld [vmem:[#allocation10 + $0xf8] sm:$0xff]
    %v247 = vld [vmem:[#allocation10 + $0x100] sm:$0xff]
    %v248 = vld [vmem:[#allocation10 + $0x108] sm:$0xff]
    %v249 = vld [vmem:[#allocation10 + $0x110] sm:$0xff]
    %v250 = vld [vmem:[#allocation10 + $0x118] sm:$0xff]
    %v251 = vld [vmem:[#allocation10 + $0x120] sm:$0xff]
    %v252 = vld [vmem:[#allocation10 + $0x128] sm:$0xff]
    %v253 = vld [vmem:[#allocation10 + $0x130] sm:$0xff]
    %v254 = vld [vmem:[#allocation10 + $0x138] sm:$0xff]
    %v255 = vld [vmem:[#allocation10 + $0x140] sm:$0xff]
    %v256 = vld [vmem:[#allocation10 + $0x148] sm:$0xff]
    %v257 = vld [vmem:[#allocation10 + $0x150] sm:$0xff]
    %v258 = vld [vmem:[#allocation10 + $0x158] sm:$0xff]
    %v259 = vld [vmem:[#allocation10 + $0x160] sm:$0xff]
    %v260 = vld [vmem:[#allocation10 + $0x168] sm:$0xff]
    %v261 = vld [vmem:[#allocation10 + $0x170] sm:$0xff]
    %v262 = vld [vmem:[#allocation10 + $0x178] sm:$0xff]
    %v263 = vld [vmem:[#allocation10 + $0x180] sm:$0xff]
    %v264 = vld [vmem:[#allocation10 + $0x188] sm:$0xff]
    %v265 = vld [vmem:[#allocation10 + $0x190] sm:$0xff]
    %v266 = vld [vmem:[#allocation10 + $0x198] sm:$0xff]
    %v267 = vld [vmem:[#allocation10 + $0x1a0] sm:$0xff]
    %v268 = vld [vmem:[#allocation10 + $0x1a8] sm:$0xff]
    %v269 = vld [vmem:[#allocation10 + $0x1b0] sm:$0xff]
    %v270 = vld [vmem:[#allocation10 + $0x1b8] sm:$0xff]
    %v271 = vld [vmem:[#allocation10 + $0x1c0] sm:$0xff]
    %v272 = vld [vmem:[#allocation10 + $0x1c8] sm:$0xff]
    %v273 = vld [vmem:[#allocation10 + $0x1d0] sm:$0xff]
    %v274 = vld [vmem:[#allocation10 + $0x1d8] sm:$0xff]
    %v275 = vld [vmem:[#allocation10 + $0x1e0] sm:$0xff]
    %v276 = vld [vmem:[#allocation10 + $0x1e8] sm:$0xff]
    %v277 = vld [vmem:[#allocation10 + $0x1f0] sm:$0xff]
    %v278 = vld [vmem:[#allocation10 + $0x1f8] sm:$0xff]
    %v279 = vld [vmem:[%s7] sm:$0xff]
    %v280 = vld [vmem:[%s7 + $0x8] sm:$0xff]
    %v281 = vld [vmem:[%s7 + $0x10] sm:$0xff]
    %v282 = vld [vmem:[%s7 + $0x18] sm:$0xff]
    %v283 = vld [vmem:[#allocation11] sm:$0xff]
    %v284 = vld [vmem:[#allocation11 + $0x8] sm:$0xff]
    %v285 = vld [vmem:[#allocation11 + $0x10] sm:$0x3f]
    %v286 = vperm.slane %v283, 0
    %vm287 = vcmask 130048
    %v289 = vsel %vm287, %v128, 0
    %291 = vmatpush.msra.mxu0 0.0
    %292 = vmatpush.msra.mxu0 0.0
    %293 = vmatpush.msra.mxu0 0.0
    %294 = vmatpush.msra.mxu0 0.0
    %295 = vmatpush.msra.mxu0 0.0
    %296 = vmatpush.msra.mxu0 0.0
    %297 = vmatpush.msra.mxu0 0.0
    %298 = vmatpush.msra.mxu0 0.0
    %299 = vmatpush.msra.mxu0 0.0
    %300 = vmatpush.msra.mxu0 0.0
    %301 = vmatpush.msra.mxu0 0.0
    %302 = vmatpush.msra.mxu0 0.0
    %303 = vmatpush.msra.mxu0 0.0
    %304 = vmatpush.msra.mxu0 0.0
    %305 = vmatpush.msra.mxu0 %v130
    %306 = vmatpush.msra.mxu0 %v129
    %307 = vmatmul.f32.gmra.mxu0 %v289
    %v308 = vpop.f32.mrf.mxu0
    %v309 = vadd.f32 %v286, %v308
    %310 = vdwg.mxu0
    %v311 = vmax.f32 %v309, 0.0
    %v312 = vpack.c.bf16 %v311, %v311
    %v317 = vunpack.c.l.b16 %v131
    %v318 = vunpack.c.l.b16 %v132
    %v319 = vunpack.c.l.b16 %v133
    %v320 = vunpack.c.l.b16 %v134
    %v321 = vpack.c.b16 %v318, %v317
    %v322 = vpack.c.b16 %v320, %v319
    %vm325 = vcmask 261120
    %v327 = vsel %vm325, %v312, 0
    %329 = vmatpush.bf16.msra.mxu0 0
    %330 = vmatpush.bf16.msra.mxu0 0
    %331 = vmatpush.bf16.msra.mxu0 0
    %332 = vmatpush.bf16.msra.mxu0 0
    %333 = vmatpush.bf16.msra.mxu0 0
    %334 = vmatpush.bf16.msra.mxu0 0
    %335 = vmatpush.bf16.msra.mxu0 %v322
    %336 = vmatpush.bf16.msra.mxu0 %v321
    %337 = vmatmul.bf16.gmra.mxu0 %v327
    %v338 = vpop.f32.mrf.mxu0
    %v339 = vadd.f32 0.0, %v338
    %v340 = vpop.f32.mrf.mxu0
    %341 = vdwg.mxu0
    %v342 = vperm.slane %v283, 4
    %v343 = vadd.f32 %v339, %v342
    %v344 = vperm.slane %v283, 5
    %346 = vrot.lane.b32.xlu0 %v344, 32
    %v347 = vpop.permute.xlu0 %346
    %v349 = vadd.f32 %v339, %v347
    %v350 = vperm.slane %v283, 6
    %352 = vrot.lane.b32.xlu0 %v350, 64
    %v353 = vpop.permute.xlu0 %352
    %v355 = vadd.f32 %v339, %v353
    %v356 = vmul.f32 %v343, 0.25
    %358 = vrot.lane.b32.xlu0 %v349, 96
    %v359 = vpop.permute.xlu0 %358
    %v361 = vsel %vm287, %v356, 0
    %v363 = vsel %vm287, %v359, 0
    %365 = vmatpush.xpose.msra.mxu0 0.0
    %366 = vmatpush.xpose.msra.mxu0 0.0
    %367 = vmatpush.xpose.msra.mxu0 0.0
    %368 = vmatpush.xpose.msra.mxu0 0.0
    %369 = vmatpush.xpose.msra.mxu0 0.0
    %370 = vmatpush.xpose.msra.mxu0 0.0
    %371 = vmatpush.xpose.msra.mxu0 0.0
    %372 = vmatpush.xpose.msra.mxu0 0.0
    %373 = vmatpush.xpose.msra.mxu0 0.0
    %374 = vmatpush.xpose.msra.mxu0 0.0
    %375 = vmatpush.xpose.msra.mxu0 0.0
    %376 = vmatpush.xpose.msra.mxu0 0.0
    %377 = vmatpush.xpose.msra.mxu0 0.0
    %378 = vmatpush.xpose.msra.mxu0 0.0
    %379 = vmatpush.xpose.msra.mxu0 0.0
    %380 = vmatpush.xpose.msra.mxu0 %v363
    %381 = vmatmul.f32.gmra.mxu0 %v361
    %v382 = vpop.f32.mrf.mxu0
    %v383 = vadd.f32 0.0, %v382
    %384 = vdwg.mxu0
    %vm385 = vcmask 64512
    %v386 = vsel %vm385, %v383, -inf
    %387 = vmax.xlane.f32.xlu0 %v386
    %v388 = vpop.xlane.xlu0 %387
    %v389 = vsub.f32 %v383, %v388
    %v390 = vmul.f32 %v389, 1.442695
    %v391 = vpow.pop %v390
    %v392 = vsel %vm385, %v391, 0.0
    %393 = vadd.xlane.f32.xlu0 %v392
    %v394 = vpop.xlane.xlu0 %393
    %v395 = vrcp.pop %v394
    %v396 = vmul.f32 %v391, %v395
    %398 = vrot.lane.b32.xlu0 %v355, 64
    %v399 = vpop.permute.xlu0 %398
    %v402 = vsel %vm385, %v396, 0
    %404 = vmatpush.msra.mxu0 0.0
    %405 = vmatpush.msra.mxu0 0.0
    %406 = vmatpush.msra.mxu0 0.0
    %407 = vmatpush.msra.mxu0 0.0
    %408 = vmatpush.msra.mxu0 0.0
    %409 = vmatpush.msra.mxu0 0.0
    %410 = vmatpush.msra.mxu0 0.0
    %411 = vmatpush.msra.mxu0 0.0
    %412 = vmatpush.msra.mxu0 0.0
    %413 = vmatpush.msra.mxu0 0.0
    %414 = vmatpush.msra.mxu0 0.0
    %415 = vmatpush.msra.mxu0 0.0
    %416 = vmatpush.msra.mxu0 0.0
    %417 = vmatpush.msra.mxu0 0.0
    %418 = vmatpush.msra.mxu0 0.0
    %419 = vmatpush.msra.mxu0 %v399
    %420 = vmatmul.f32.gmra.mxu0 %v402
    %v421 = vpop.f32.mrf.mxu0
    %v422 = vadd.f32 0.0, %v421
    %423 = vdwg.mxu0
    %424 = vrot.lane.b32.xlu0 %v356, 112
    %v425 = vpop.permute.xlu0 %424
    %426 = vrot.lane.b32.xlu0 %v349, 80
    %v427 = vpop.permute.xlu0 %426
    %v428 = vsel %vm287, %v425, 0
    %v430 = vsel %vm287, %v427, 0
    %432 = vmatpush.xpose.msra.mxu0 0.0
    %433 = vmatpush.xpose.msra.mxu0 0.0
    %434 = vmatpush.xpose.msra.mxu0 0.0
    %435 = vmatpush.xpose.msra.mxu0 0.0
    %436 = vmatpush.xpose.msra.mxu0 0.0
    %437 = vmatpush.xpose.msra.mxu0 0.0
    %438 = vmatpush.xpose.msra.mxu0 0.0
    %439 = vmatpush.xpose.msra.mxu0 0.0
    %440 = vmatpush.xpose.msra.mxu0 0.0
    %441 = vmatpush.xpose.msra.mxu0 0.0
    %442 = vmatpush.xpose.msra.mxu0 0.0
    %443 = vmatpush.xpose.msra.mxu0 0.0
    %444 = vmatpush.xpose.msra.mxu0 0.0
    %445 = vmatpush.xpose.msra.mxu0 0.0
    %446 = vmatpush.xpose.msra.mxu0 0.0
    %447 = vmatpush.xpose.msra.mxu0 %v430
    %448 = vmatmul.f32.gmra.mxu0 %v428
    %v449 = vpop.f32.mrf.mxu0
    %v450 = vadd.f32 0.0, %v449
    %451 = vdwg.mxu0
    %v452 = vsel %vm385, %v450, -inf
    %453 = vmax.xlane.f32.xlu0 %v452
    %v454 = vpop.xlane.xlu0 %453
    %v455 = vsub.f32 %v450, %v454
    %v456 = vmul.f32 %v455, 1.442695
    %v457 = vpow.pop %v456
    %v458 = vsel %vm385, %v457, 0.0
    %459 = vadd.xlane.f32.xlu0 %v458
    %v460 = vpop.xlane.xlu0 %459
    %v461 = vrcp.pop %v460
    %v462 = vmul.f32 %v457, %v461
    %463 = vrot.lane.b32.xlu0 %v355, 48
    %v464 = vpop.permute.xlu0 %463
    %v467 = vsel %vm385, %v462, 0
    %469 = vmatpush.msra.mxu0 0.0
    %470 = vmatpush.msra.mxu0 0.0
    %471 = vmatpush.msra.mxu0 0.0
    %472 = vmatpush.msra.mxu0 0.0
    %473 = vmatpush.msra.mxu0 0.0
    %474 = vmatpush.msra.mxu0 0.0
    %475 = vmatpush.msra.mxu0 0.0
    %476 = vmatpush.msra.mxu0 0.0
    %477 = vmatpush.msra.mxu0 0.0
    %478 = vmatpush.msra.mxu0 0.0
    %479 = vmatpush.msra.mxu0 0.0
    %480 = vmatpush.msra.mxu0 0.0
    %481 = vmatpush.msra.mxu0 0.0
    %482 = vmatpush.msra.mxu0 0.0
    %483 = vmatpush.msra.mxu0 0.0
    %484 = vmatpush.msra.mxu0 %v464
    %485 = vmatmul.f32.gmra.mxu0 %v467
    %v486 = vpop.f32.mrf.mxu0
    %v487 = vadd.f32 0.0, %v486
    %488 = vdwg.mxu0
    %490 = vrot.lane.b32.xlu0 %v487, 16
    %v491 = vpop.permute.xlu0 %490
    %v493 = vsel %vm287, %v422, %v491
    %v494 = vpack.c.bf16 %v493, %v493
    %v495 = vperm.slane %v283, 7
    %v500 = vunpack.c.l.b16 %v139
    %v501 = vunpack.c.l.b16 %v140
    %v502 = vunpack.c.l.b16 %v141
    %v503 = vunpack.c.l.b16 %v142
    %v504 = vpack.c.b16 %v501, %v500
    %v505 = vpack.c.b16 %v503, %v502
    %v509 = vsel %vm325, %v494, 0
    %511 = vmatpush.bf16.msra.mxu0 0
    %512 = vmatpush.bf16.msra.mxu0 0
    %513 = vmatpush.bf16.msra.mxu0 0
    %514 = vmatpush.bf16.msra.mxu0 0
    %515 = vmatpush.bf16.msra.mxu0 0
    %516 = vmatpush.bf16.msra.mxu0 0
    %517 = vmatpush.bf16.msra.mxu0 %v505
    %518 = vmatpush.bf16.msra.mxu0 %v504
    %519 = vmatmul.bf16.gmra.mxu0 %v509
    %v520 = vpop.f32.mrf.mxu0
    %v521 = vadd.f32 %v495, %v520
    %v522 = vpop.f32.mrf.mxu0
    %523 = vdwg.mxu0
    %v524 = vadd.f32 %v311, %v521
    %v525 = vsel %vm325, %v524, 0.0
    %526 = vadd.xlane.f32.xlu0 %v525
    %v527 = vpop.xlane.xlu0 %526
    %v528 = vrcp.pop 32.0
    %v529 = vmul.f32 32.0, %v528
    %v530 = vsub.f32 1.0, %v529
    %v531 = vmul.f32 %v528, %v530
    %v532 = vadd.f32 %v528, %v531
    %vm533 = vweird.f32 %v528
    %v534 = vsel %vm533, %v528, %v532
    %v535 = vmul.f32 %v527, %v534
    %v536 = vsub.f32 %v524, %v535
    %v537 = vmul.f32 %v536, %v536
    %v538 = vsel %vm325, %v537, 0.0
    %539 = vadd.xlane.f32.xlu0 %v538
    %v540 = vpop.xlane.xlu0 %539
    %v541 = vmul.f32 %v540, %v534
    %v542 = vadd.f32 %v541, 1e-05
    %v543 = vrsqrt.pop %v542
    %v544 = vmul.f32 %v543, %v542
    %v545 = vmul.f32 %v544, %v543
    %v546 = vmul.f32 0.5, %v545
    %v547 = vsub.f32 1.5, %v546
    %v548 = vmul.f32 %v543, %v547
    %vm549 = vweird.f32 %v542
    %vm550 = vweird.f32 %v543
    %vm551 = vmor %vm549, %vm550
    %v552 = vsel %vm551, %v543, %v548
    %v553 = vmul.f32 %v536, %v552
    %v554 = vperm.slane %v284, 0
    %v555 = vmul.f32 %v553, %v554
    %v556 = vperm.slane %v284, 1
    %v557 = vadd.f32 %v555, %v556
    %v558 = vpack.c.bf16 %v557, %v557
    %v561 = vperm.slane %v211, 0
    %v562 = vperm.slane %v211, 1
    %v563 = vperm.slane %v211, 2
    %v564 = vperm.slane %v211, 3
    %v565 = vperm.slane %v211, 4
    %v566 = vperm.slane %v211, 5
    %v567 = vperm.slane %v211, 6
    %v568 = vperm.slane %v211, 7
    %v569 = vperm.slane %v212, 0
    %v570 = vperm.slane %v212, 1
    %v571 = vperm.slane %v212, 2
    %v572 = vperm.slane %v212, 3
    %v573 = vperm.slane %v212, 4
    %v574 = vperm.slane %v212, 5
    %v575 = vperm.slane %v212, 6
    %v576 = vperm.slane %v212, 7
    %v625 = vunpack.c.l.b16 %v147
    %v626 = vunpack.c.h.b16 %v147
    %v627 = vunpack.c.l.b16 %v148
    %v628 = vunpack.c.h.b16 %v148
    %v629 = vunpack.c.l.b16 %v149
    %v630 = vunpack.c.h.b16 %v149
    %v631 = vunpack.c.l.b16 %v150
    %v632 = vunpack.c.h.b16 %v150
    %v633 = vunpack.c.l.b16 %v151
    %v634 = vunpack.c.h.b16 %v151
    %v635 = vunpack.c.l.b16 %v152
    %v636 = vunpack.c.h.b16 %v152
    %v637 = vunpack.c.l.b16 %v153
    %v638 = vunpack.c.h.b16 %v153
    %v639 = vunpack.c.l.b16 %v154
    %v640 = vunpack.c.h.b16 %v154
    %v641 = vunpack.c.l.b16 %v155
    %v642 = vunpack.c.h.b16 %v155
    %v643 = vunpack.c.l.b16 %v156
    %v644 = vunpack.c.h.b16 %v156
    %v645 = vunpack.c.l.b16 %v157
    %v646 = vunpack.c.h.b16 %v157
    %v647 = vunpack.c.l.b16 %v158
    %v648 = vunpack.c.h.b16 %v158
    %v649 = vunpack.c.l.b16 %v159
    %v650 = vunpack.c.h.b16 %v159
    %v651 = vunpack.c.l.b16 %v160
    %v652 = vunpack.c.h.b16 %v160
    %v653 = vunpack.c.l.b16 %v161
    %v654 = vunpack.c.h.b16 %v161
    %v655 = vunpack.c.l.b16 %v162
    %v656 = vunpack.c.h.b16 %v162
    %v657 = vunpack.c.l.b16 %v163
    %v658 = vunpack.c.h.b16 %v163
    %v659 = vunpack.c.l.b16 %v164
    %v660 = vunpack.c.h.b16 %v164
    %v661 = vunpack.c.l.b16 %v165
    %v662 = vunpack.c.h.b16 %v165
    %v663 = vunpack.c.l.b16 %v166
    %v664 = vunpack.c.h.b16 %v166
    %v665 = vunpack.c.l.b16 %v167
    %v666 = vunpack.c.h.b16 %v167
    %v667 = vunpack.c.l.b16 %v168
    %v668 = vunpack.c.h.b16 %v168
    %v669 = vunpack.c.l.b16 %v169
    %v670 = vunpack.c.h.b16 %v169
    %v671 = vunpack.c.l.b16 %v170
    %v672 = vunpack.c.h.b16 %v170
    %v673 = vunpack.c.l.b16 %v171
    %v674 = vunpack.c.h.b16 %v171
    %v675 = vunpack.c.l.b16 %v172
    %v676 = vunpack.c.h.b16 %v172
    %v677 = vunpack.c.l.b16 %v173
    %v678 = vunpack.c.h.b16 %v173
    %v679 = vunpack.c.l.b16 %v174
    %v680 = vunpack.c.h.b16 %v174
    %v681 = vunpack.c.l.b16 %v175
    %v682 = vunpack.c.h.b16 %v175
    %v683 = vunpack.c.l.b16 %v176
    %v684 = vunpack.c.h.b16 %v176
    %v685 = vunpack.c.l.b16 %v177
    %v686 = vunpack.c.h.b16 %v177
    %v687 = vunpack.c.l.b16 %v178
    %v688 = vunpack.c.h.b16 %v178
    %v689 = vpack.c.b16 %v641, %v625
    %v690 = vpack.c.b16 %v642, %v626
    %v691 = vpack.c.b16 %v643, %v627
    %v692 = vpack.c.b16 %v644, %v628
    %v693 = vpack.c.b16 %v645, %v629
    %v694 = vpack.c.b16 %v646, %v630
    %v695 = vpack.c.b16 %v647, %v631
    %v696 = vpack.c.b16 %v648, %v632
    %v697 = vpack.c.b16 %v649, %v633
    %v698 = vpack.c.b16 %v650, %v634
    %v699 = vpack.c.b16 %v651, %v635
    %v700 = vpack.c.b16 %v652, %v636
    %v701 = vpack.c.b16 %v653, %v637
    %v702 = vpack.c.b16 %v654, %v638
    %v703 = vpack.c.b16 %v655, %v639
    %v704 = vpack.c.b16 %v656, %v640
    %v705 = vpack.c.b16 %v673, %v657
    %v706 = vpack.c.b16 %v674, %v658
    %v707 = vpack.c.b16 %v675, %v659
    %v708 = vpack.c.b16 %v676, %v660
    %v709 = vpack.c.b16 %v677, %v661
    %v710 = vpack.c.b16 %v678, %v662
    %v711 = vpack.c.b16 %v679, %v663
    %v712 = vpack.c.b16 %v680, %v664
    %v713 = vpack.c.b16 %v681, %v665
    %v714 = vpack.c.b16 %v682, %v666
    %v715 = vpack.c.b16 %v683, %v667
    %v716 = vpack.c.b16 %v684, %v668
    %v717 = vpack.c.b16 %v685, %v669
    %v718 = vpack.c.b16 %v686, %v670
    %v719 = vpack.c.b16 %v687, %v671
    %v720 = vpack.c.b16 %v688, %v672
    %v754 = vsel %vm325, %v558, 0
    %756 = vmatpush.bf16.msra.mxu0 0
    %757 = vmatpush.bf16.msra.mxu0 0
    %758 = vmatpush.bf16.msra.mxu0 0
    %759 = vmatpush.bf16.msra.mxu0 0
    %760 = vmatpush.bf16.msra.mxu0 0
    %761 = vmatpush.bf16.msra.mxu0 0
    %762 = vmatpush.bf16.msra.mxu0 %v705
    %763 = vmatpush.bf16.msra.mxu0 %v689
    %764 = vmatmul.bf16.gmra.mxu0 %v754
    %v765 = vpop.f32.mrf.mxu0
    %v766 = vadd.f32 %v561, %v765
    %v767 = vpop.f32.mrf.mxu0
    %768 = vdwg.mxu0
    %769 = vmatpush.bf16.msra.mxu0 0
    %770 = vmatpush.bf16.msra.mxu0 0
    %771 = vmatpush.bf16.msra.mxu0 0
    %772 = vmatpush.bf16.msra.mxu0 0
    %773 = vmatpush.bf16.msra.mxu0 0
    %774 = vmatpush.bf16.msra.mxu0 0
    %775 = vmatpush.bf16.msra.mxu0 %v706
    %776 = vmatpush.bf16.msra.mxu0 %v690
    %777 = vmatmul.bf16.gmra.mxu0 %v754
    %v778 = vpop.f32.mrf.mxu0
    %v779 = vadd.f32 %v562, %v778
    %v780 = vpop.f32.mrf.mxu0
    %781 = vdwg.mxu0
    %782 = vmatpush.bf16.msra.mxu0 0
    %783 = vmatpush.bf16.msra.mxu0 0
    %784 = vmatpush.bf16.msra.mxu0 0
    %785 = vmatpush.bf16.msra.mxu0 0
    %786 = vmatpush.bf16.msra.mxu0 0
    %787 = vmatpush.bf16.msra.mxu0 0
    %788 = vmatpush.bf16.msra.mxu0 %v707
    %789 = vmatpush.bf16.msra.mxu0 %v691
    %790 = vmatmul.bf16.gmra.mxu0 %v754
    %v791 = vpop.f32.mrf.mxu0
    %v792 = vadd.f32 %v563, %v791
    %v793 = vpop.f32.mrf.mxu0
    %794 = vdwg.mxu0
    %795 = vmatpush.bf16.msra.mxu0 0
    %796 = vmatpush.bf16.msra.mxu0 0
    %797 = vmatpush.bf16.msra.mxu0 0
    %798 = vmatpush.bf16.msra.mxu0 0
    %799 = vmatpush.bf16.msra.mxu0 0
    %800 = vmatpush.bf16.msra.mxu0 0
    %801 = vmatpush.bf16.msra.mxu0 %v708
    %802 = vmatpush.bf16.msra.mxu0 %v692
    %803 = vmatmul.bf16.gmra.mxu0 %v754
    %v804 = vpop.f32.mrf.mxu0
    %v805 = vadd.f32 %v564, %v804
    %v806 = vpop.f32.mrf.mxu0
    %807 = vdwg.mxu0
    %808 = vmatpush.bf16.msra.mxu0 0
    %809 = vmatpush.bf16.msra.mxu0 0
    %810 = vmatpush.bf16.msra.mxu0 0
    %811 = vmatpush.bf16.msra.mxu0 0
    %812 = vmatpush.bf16.msra.mxu0 0
    %813 = vmatpush.bf16.msra.mxu0 0
    %814 = vmatpush.bf16.msra.mxu0 %v709
    %815 = vmatpush.bf16.msra.mxu0 %v693
    %816 = vmatmul.bf16.gmra.mxu0 %v754
    %v817 = vpop.f32.mrf.mxu0
    %v818 = vadd.f32 %v565, %v817
    %v819 = vpop.f32.mrf.mxu0
    %820 = vdwg.mxu0
    %821 = vmatpush.bf16.msra.mxu0 0
    %822 = vmatpush.bf16.msra.mxu0 0
    %823 = vmatpush.bf16.msra.mxu0 0
    %824 = vmatpush.bf16.msra.mxu0 0
    %825 = vmatpush.bf16.msra.mxu0 0
    %826 = vmatpush.bf16.msra.mxu0 0
    %827 = vmatpush.bf16.msra.mxu0 %v710
    %828 = vmatpush.bf16.msra.mxu0 %v694
    %829 = vmatmul.bf16.gmra.mxu0 %v754
    %v830 = vpop.f32.mrf.mxu0
    %v831 = vadd.f32 %v566, %v830
    %v832 = vpop.f32.mrf.mxu0
    %833 = vdwg.mxu0
    %834 = vmatpush.bf16.msra.mxu0 0
    %835 = vmatpush.bf16.msra.mxu0 0
    %836 = vmatpush.bf16.msra.mxu0 0
    %837 = vmatpush.bf16.msra.mxu0 0
    %838 = vmatpush.bf16.msra.mxu0 0
    %839 = vmatpush.bf16.msra.mxu0 0
    %840 = vmatpush.bf16.msra.mxu0 %v711
    %841 = vmatpush.bf16.msra.mxu0 %v695
    %842 = vmatmul.bf16.gmra.mxu0 %v754
    %v843 = vpop.f32.mrf.mxu0
    %v844 = vadd.f32 %v567, %v843
    %v845 = vpop.f32.mrf.mxu0
    %846 = vdwg.mxu0
    %847 = vmatpush.bf16.msra.mxu0 0
    %848 = vmatpush.bf16.msra.mxu0 0
    %849 = vmatpush.bf16.msra.mxu0 0
    %850 = vmatpush.bf16.msra.mxu0 0
    %851 = vmatpush.bf16.msra.mxu0 0
    %852 = vmatpush.bf16.msra.mxu0 0
    %853 = vmatpush.bf16.msra.mxu0 %v712
    %854 = vmatpush.bf16.msra.mxu0 %v696
    %855 = vmatmul.bf16.gmra.mxu0 %v754
    %v856 = vpop.f32.mrf.mxu0
    %v857 = vadd.f32 %v568, %v856
    %v858 = vpop.f32.mrf.mxu0
    %859 = vdwg.mxu0
    %860 = vmatpush.bf16.msra.mxu0 0
    %861 = vmatpush.bf16.msra.mxu0 0
    %862 = vmatpush.bf16.msra.mxu0 0
    %863 = vmatpush.bf16.msra.mxu0 0
    %864 = vmatpush.bf16.msra.mxu0 0
    %865 = vmatpush.bf16.msra.mxu0 0
    %866 = vmatpush.bf16.msra.mxu0 %v713
    %867 = vmatpush.bf16.msra.mxu0 %v697
    %868 = vmatmul.bf16.gmra.mxu0 %v754
    %v869 = vpop.f32.mrf.mxu0
    %v870 = vadd.f32 %v569, %v869
    %v871 = vpop.f32.mrf.mxu0
    %872 = vdwg.mxu0
    %873 = vmatpush.bf16.msra.mxu0 0
    %874 = vmatpush.bf16.msra.mxu0 0
    %875 = vmatpush.bf16.msra.mxu0 0
    %876 = vmatpush.bf16.msra.mxu0 0
    %877 = vmatpush.bf16.msra.mxu0 0
    %878 = vmatpush.bf16.msra.mxu0 0
    %879 = vmatpush.bf16.msra.mxu0 %v714
    %880 = vmatpush.bf16.msra.mxu0 %v698
    %881 = vmatmul.bf16.gmra.mxu0 %v754
    %v882 = vpop.f32.mrf.mxu0
    %v883 = vadd.f32 %v570, %v882
    %v884 = vpop.f32.mrf.mxu0
    %885 = vdwg.mxu0
    %886 = vmatpush.bf16.msra.mxu0 0
    %887 = vmatpush.bf16.msra.mxu0 0
    %888 = vmatpush.bf16.msra.mxu0 0
    %889 = vmatpush.bf16.msra.mxu0 0
    %890 = vmatpush.bf16.msra.mxu0 0
    %891 = vmatpush.bf16.msra.mxu0 0
    %892 = vmatpush.bf16.msra.mxu0 %v715
    %893 = vmatpush.bf16.msra.mxu0 %v699
    %894 = vmatmul.bf16.gmra.mxu0 %v754
    %v895 = vpop.f32.mrf.mxu0
    %v896 = vadd.f32 %v571, %v895
    %v897 = vpop.f32.mrf.mxu0
    %898 = vdwg.mxu0
    %899 = vmatpush.bf16.msra.mxu0 0
    %900 = vmatpush.bf16.msra.mxu0 0
    %901 = vmatpush.bf16.msra.mxu0 0
    %902 = vmatpush.bf16.msra.mxu0 0
    %903 = vmatpush.bf16.msra.mxu0 0
    %904 = vmatpush.bf16.msra.mxu0 0
    %905 = vmatpush.bf16.msra.mxu0 %v716
    %906 = vmatpush.bf16.msra.mxu0 %v700
    %907 = vmatmul.bf16.gmra.mxu0 %v754
    %v908 = vpop.f32.mrf.mxu0
    %v909 = vadd.f32 %v572, %v908
    %v910 = vpop.f32.mrf.mxu0
    %911 = vdwg.mxu0
    %912 = vmatpush.bf16.msra.mxu0 0
    %913 = vmatpush.bf16.msra.mxu0 0
    %914 = vmatpush.bf16.msra.mxu0 0
    %915 = vmatpush.bf16.msra.mxu0 0
    %916 = vmatpush.bf16.msra.mxu0 0
    %917 = vmatpush.bf16.msra.mxu0 0
    %918 = vmatpush.bf16.msra.mxu0 %v717
    %919 = vmatpush.bf16.msra.mxu0 %v701
    %920 = vmatmul.bf16.gmra.mxu0 %v754
    %v921 = vpop.f32.mrf.mxu0
    %v922 = vadd.f32 %v573, %v921
    %v923 = vpop.f32.mrf.mxu0
    %924 = vdwg.mxu0
    %925 = vmatpush.bf16.msra.mxu0 0
    %926 = vmatpush.bf16.msra.mxu0 0
    %927 = vmatpush.bf16.msra.mxu0 0
    %928 = vmatpush.bf16.msra.mxu0 0
    %929 = vmatpush.bf16.msra.mxu0 0
    %930 = vmatpush.bf16.msra.mxu0 0
    %931 = vmatpush.bf16.msra.mxu0 %v718
    %932 = vmatpush.bf16.msra.mxu0 %v702
    %933 = vmatmul.bf16.gmra.mxu0 %v754
    %v934 = vpop.f32.mrf.mxu0
    %v935 = vadd.f32 %v574, %v934
    %v936 = vpop.f32.mrf.mxu0
    %937 = vdwg.mxu0
    %938 = vmatpush.bf16.msra.mxu0 0
    %939 = vmatpush.bf16.msra.mxu0 0
    %940 = vmatpush.bf16.msra.mxu0 0
    %941 = vmatpush.bf16.msra.mxu0 0
    %942 = vmatpush.bf16.msra.mxu0 0
    %943 = vmatpush.bf16.msra.mxu0 0
    %944 = vmatpush.bf16.msra.mxu0 %v719
    %945 = vmatpush.bf16.msra.mxu0 %v703
    %946 = vmatmul.bf16.gmra.mxu0 %v754
    %v947 = vpop.f32.mrf.mxu0
    %v948 = vadd.f32 %v575, %v947
    %v949 = vpop.f32.mrf.mxu0
    %950 = vdwg.mxu0
    %951 = vmatpush.bf16.msra.mxu0 0
    %952 = vmatpush.bf16.msra.mxu0 0
    %953 = vmatpush.bf16.msra.mxu0 0
    %954 = vmatpush.bf16.msra.mxu0 0
    %955 = vmatpush.bf16.msra.mxu0 0
    %956 = vmatpush.bf16.msra.mxu0 0
    %957 = vmatpush.bf16.msra.mxu0 %v720
    %958 = vmatpush.bf16.msra.mxu0 %v704
    %959 = vmatmul.bf16.gmra.mxu0 %v754
    %v960 = vpop.f32.mrf.mxu0
    %v961 = vadd.f32 %v576, %v960
    %v962 = vpop.f32.mrf.mxu0
    %963 = vdwg.mxu0
    %v964 = vmax.f32 %v766, 0.0
    %v965 = vmax.f32 %v779, 0.0
    %v966 = vmax.f32 %v792, 0.0
    %v967 = vmax.f32 %v805, 0.0
    %v968 = vmax.f32 %v818, 0.0
    %v969 = vmax.f32 %v831, 0.0
    %v970 = vmax.f32 %v844, 0.0
    %v971 = vmax.f32 %v857, 0.0
    %v972 = vmax.f32 %v870, 0.0
    %v973 = vmax.f32 %v883, 0.0
    %v974 = vmax.f32 %v896, 0.0
    %v975 = vmax.f32 %v909, 0.0
    %v976 = vmax.f32 %v922, 0.0
    %v977 = vmax.f32 %v935, 0.0
    %v978 = vmax.f32 %v948, 0.0
    %v979 = vmax.f32 %v961, 0.0
    %v980 = vpack.c.bf16 %v964, %v964
    %v981 = vpack.c.bf16 %v965, %v965
    %v982 = vpack.c.bf16 %v966, %v966
    %v983 = vpack.c.bf16 %v967, %v967
    %v984 = vpack.c.bf16 %v968, %v968
    %v985 = vpack.c.bf16 %v969, %v969
    %v986 = vpack.c.bf16 %v970, %v970
    %v987 = vpack.c.bf16 %v971, %v971
    %v988 = vpack.c.bf16 %v972, %v972
    %v989 = vpack.c.bf16 %v973, %v973
    %v990 = vpack.c.bf16 %v974, %v974
    %v991 = vpack.c.bf16 %v975, %v975
    %v992 = vpack.c.bf16 %v976, %v976
    %v993 = vpack.c.bf16 %v977, %v977
    %v994 = vpack.c.bf16 %v978, %v978
    %v995 = vpack.c.bf16 %v979, %v979
    %v996 = vperm.slane %v284, 4
    %v1029 = vunpack.c.l.b16 %v215
    %v1030 = vunpack.c.h.b16 %v215
    %v1031 = vunpack.c.l.b16 %v216
    %v1032 = vunpack.c.h.b16 %v216
    %v1033 = vunpack.c.l.b16 %v217
    %v1034 = vunpack.c.h.b16 %v217
    %v1035 = vunpack.c.l.b16 %v218
    %v1036 = vunpack.c.h.b16 %v218
    %v1037 = vunpack.c.l.b16 %v219
    %v1038 = vunpack.c.h.b16 %v219
    %v1039 = vunpack.c.l.b16 %v220
    %v1040 = vunpack.c.h.b16 %v220
    %v1041 = vunpack.c.l.b16 %v221
    %v1042 = vunpack.c.h.b16 %v221
    %v1043 = vunpack.c.l.b16 %v222
    %v1044 = vunpack.c.h.b16 %v222
    %v1045 = vunpack.c.l.b16 %v223
    %v1046 = vunpack.c.h.b16 %v223
    %v1047 = vunpack.c.l.b16 %v224
    %v1048 = vunpack.c.h.b16 %v224
    %v1049 = vunpack.c.l.b16 %v225
    %v1050 = vunpack.c.h.b16 %v225
    %v1051 = vunpack.c.l.b16 %v226
    %v1052 = vunpack.c.h.b16 %v226
    %v1053 = vunpack.c.l.b16 %v227
    %v1054 = vunpack.c.h.b16 %v227
    %v1055 = vunpack.c.l.b16 %v228
    %v1056 = vunpack.c.h.b16 %v228
    %v1057 = vunpack.c.l.b16 %v229
    %v1058 = vunpack.c.h.b16 %v229
    %v1059 = vunpack.c.l.b16 %v230
    %v1060 = vunpack.c.h.b16 %v230
    %v1061 = vunpack.c.l.b16 %v231
    %v1062 = vunpack.c.h.b16 %v231
    %v1063 = vunpack.c.l.b16 %v232
    %v1064 = vunpack.c.h.b16 %v232
    %v1065 = vunpack.c.l.b16 %v233
    %v1066 = vunpack.c.h.b16 %v233
    %v1067 = vunpack.c.l.b16 %v234
    %v1068 = vunpack.c.h.b16 %v234
    %v1069 = vunpack.c.l.b16 %v235
    %v1070 = vunpack.c.h.b16 %v235
    %v1071 = vunpack.c.l.b16 %v236
    %v1072 = vunpack.c.h.b16 %v236
    %v1073 = vunpack.c.l.b16 %v237
    %v1074 = vunpack.c.h.b16 %v237
    %v1075 = vunpack.c.l.b16 %v238
    %v1076 = vunpack.c.h.b16 %v238
    %v1077 = vunpack.c.l.b16 %v239
    %v1078 = vunpack.c.h.b16 %v239
    %v1079 = vunpack.c.l.b16 %v240
    %v1080 = vunpack.c.h.b16 %v240
    %v1081 = vunpack.c.l.b16 %v241
    %v1082 = vunpack.c.h.b16 %v241
    %v1083 = vunpack.c.l.b16 %v242
    %v1084 = vunpack.c.h.b16 %v242
    %v1085 = vunpack.c.l.b16 %v243
    %v1086 = vunpack.c.h.b16 %v243
    %v1087 = vunpack.c.l.b16 %v244
    %v1088 = vunpack.c.h.b16 %v244
    %v1089 = vunpack.c.l.b16 %v245
    %v1090 = vunpack.c.h.b16 %v245
    %v1091 = vunpack.c.l.b16 %v246
    %v1092 = vunpack.c.h.b16 %v246
    %v1093 = vpack.c.b16 %v1045, %v1029
    %v1094 = vpack.c.b16 %v1046, %v1030
    %v1095 = vpack.c.b16 %v1047, %v1031
    %v1096 = vpack.c.b16 %v1048, %v1032
    %v1097 = vpack.c.b16 %v1049, %v1033
    %v1098 = vpack.c.b16 %v1050, %v1034
    %v1099 = vpack.c.b16 %v1051, %v1035
    %v1100 = vpack.c.b16 %v1052, %v1036
    %v1101 = vpack.c.b16 %v1053, %v1037
    %v1102 = vpack.c.b16 %v1054, %v1038
    %v1103 = vpack.c.b16 %v1055, %v1039
    %v1104 = vpack.c.b16 %v1056, %v1040
    %v1105 = vpack.c.b16 %v1057, %v1041
    %v1106 = vpack.c.b16 %v1058, %v1042
    %v1107 = vpack.c.b16 %v1059, %v1043
    %v1108 = vpack.c.b16 %v1060, %v1044
    %v1109 = vpack.c.b16 %v1077, %v1061
    %v1110 = vpack.c.b16 %v1078, %v1062
    %v1111 = vpack.c.b16 %v1079, %v1063
    %v1112 = vpack.c.b16 %v1080, %v1064
    %v1113 = vpack.c.b16 %v1081, %v1065
    %v1114 = vpack.c.b16 %v1082, %v1066
    %v1115 = vpack.c.b16 %v1083, %v1067
    %v1116 = vpack.c.b16 %v1084, %v1068
    %v1117 = vpack.c.b16 %v1085, %v1069
    %v1118 = vpack.c.b16 %v1086, %v1070
    %v1119 = vpack.c.b16 %v1087, %v1071
    %v1120 = vpack.c.b16 %v1088, %v1072
    %v1121 = vpack.c.b16 %v1089, %v1073
    %v1122 = vpack.c.b16 %v1090, %v1074
    %v1123 = vpack.c.b16 %v1091, %v1075
    %v1124 = vpack.c.b16 %v1092, %v1076
    %1157 = vmatpush.bf16.xpose.msra.mxu0 0
    %1158 = vmatpush.bf16.xpose.msra.mxu0 0
    %1159 = vmatpush.bf16.xpose.msra.mxu0 0
    %1160 = vmatpush.bf16.xpose.msra.mxu0 0
    %1161 = vmatpush.bf16.xpose.msra.mxu0 0
    %1162 = vmatpush.bf16.xpose.msra.mxu0 0
    %1163 = vmatpush.bf16.xpose.msra.mxu0 %v1109
    %1164 = vmatpush.bf16.xpose.msra.mxu0 %v1093
    %1165 = vmatmul.bf16.gmra.mxu0 %v980
    %v1166 = vpop.f32.mrf.mxu0
    %v1167 = vadd.f32 %v996, %v1166
    %v1168 = vpop.f32.mrf.mxu0
    %1169 = vdwg.mxu0
    %1170 = vmatpush.bf16.xpose.msra.mxu0 0
    %1171 = vmatpush.bf16.xpose.msra.mxu0 0
    %1172 = vmatpush.bf16.xpose.msra.mxu0 0
    %1173 = vmatpush.bf16.xpose.msra.mxu0 0
    %1174 = vmatpush.bf16.xpose.msra.mxu0 0
    %1175 = vmatpush.bf16.xpose.msra.mxu0 0
    %1176 = vmatpush.bf16.xpose.msra.mxu0 %v1110
    %1177 = vmatpush.bf16.xpose.msra.mxu0 %v1094
    %1178 = vmatmul.bf16.gmra.mxu0 %v981
    %v1179 = vpop.f32.mrf.mxu0
    %v1180 = vadd.f32 %v1167, %v1179
    %v1181 = vpop.f32.mrf.mxu0
    %1182 = vdwg.mxu0
    %1183 = vmatpush.bf16.xpose.msra.mxu0 0
    %1184 = vmatpush.bf16.xpose.msra.mxu0 0
    %1185 = vmatpush.bf16.xpose.msra.mxu0 0
    %1186 = vmatpush.bf16.xpose.msra.mxu0 0
    %1187 = vmatpush.bf16.xpose.msra.mxu0 0
    %1188 = vmatpush.bf16.xpose.msra.mxu0 0
    %1189 = vmatpush.bf16.xpose.msra.mxu0 %v1111
    %1190 = vmatpush.bf16.xpose.msra.mxu0 %v1095
    %1191 = vmatmul.bf16.gmra.mxu0 %v982
    %v1192 = vpop.f32.mrf.mxu0
    %v1193 = vadd.f32 %v1180, %v1192
    %v1194 = vpop.f32.mrf.mxu0
    %1195 = vdwg.mxu0
    %1196 = vmatpush.bf16.xpose.msra.mxu0 0
    %1197 = vmatpush.bf16.xpose.msra.mxu0 0
    %1198 = vmatpush.bf16.xpose.msra.mxu0 0
    %1199 = vmatpush.bf16.xpose.msra.mxu0 0
    %1200 = vmatpush.bf16.xpose.msra.mxu0 0
    %1201 = vmatpush.bf16.xpose.msra.mxu0 0
    %1202 = vmatpush.bf16.xpose.msra.mxu0 %v1112
    %1203 = vmatpush.bf16.xpose.msra.mxu0 %v1096
    %1204 = vmatmul.bf16.gmra.mxu0 %v983
    %v1205 = vpop.f32.mrf.mxu0
    %v1206 = vadd.f32 %v1193, %v1205
    %v1207 = vpop.f32.mrf.mxu0
    %1208 = vdwg.mxu0
    %1209 = vmatpush.bf16.xpose.msra.mxu0 0
    %1210 = vmatpush.bf16.xpose.msra.mxu0 0
    %1211 = vmatpush.bf16.xpose.msra.mxu0 0
    %1212 = vmatpush.bf16.xpose.msra.mxu0 0
    %1213 = vmatpush.bf16.xpose.msra.mxu0 0
    %1214 = vmatpush.bf16.xpose.msra.mxu0 0
    %1215 = vmatpush.bf16.xpose.msra.mxu0 %v1113
    %1216 = vmatpush.bf16.xpose.msra.mxu0 %v1097
    %1217 = vmatmul.bf16.gmra.mxu0 %v984
    %v1218 = vpop.f32.mrf.mxu0
    %v1219 = vadd.f32 %v1206, %v1218
    %v1220 = vpop.f32.mrf.mxu0
    %1221 = vdwg.mxu0
    %1222 = vmatpush.bf16.xpose.msra.mxu0 0
    %1223 = vmatpush.bf16.xpose.msra.mxu0 0
    %1224 = vmatpush.bf16.xpose.msra.mxu0 0
    %1225 = vmatpush.bf16.xpose.msra.mxu0 0
    %1226 = vmatpush.bf16.xpose.msra.mxu0 0
    %1227 = vmatpush.bf16.xpose.msra.mxu0 0
    %1228 = vmatpush.bf16.xpose.msra.mxu0 %v1114
    %1229 = vmatpush.bf16.xpose.msra.mxu0 %v1098
    %1230 = vmatmul.bf16.gmra.mxu0 %v985
    %v1231 = vpop.f32.mrf.mxu0
    %v1232 = vadd.f32 %v1219, %v1231
    %v1233 = vpop.f32.mrf.mxu0
    %1234 = vdwg.mxu0
    %1235 = vmatpush.bf16.xpose.msra.mxu0 0
    %1236 = vmatpush.bf16.xpose.msra.mxu0 0
    %1237 = vmatpush.bf16.xpose.msra.mxu0 0
    %1238 = vmatpush.bf16.xpose.msra.mxu0 0
    %1239 = vmatpush.bf16.xpose.msra.mxu0 0
    %1240 = vmatpush.bf16.xpose.msra.mxu0 0
    %1241 = vmatpush.bf16.xpose.msra.mxu0 %v1115
    %1242 = vmatpush.bf16.xpose.msra.mxu0 %v1099
    %1243 = vmatmul.bf16.gmra.mxu0 %v986
    %v1244 = vpop.f32.mrf.mxu0
    %v1245 = vadd.f32 %v1232, %v1244
    %v1246 = vpop.f32.mrf.mxu0
    %1247 = vdwg.mxu0
    %1248 = vmatpush.bf16.xpose.msra.mxu0 0
    %1249 = vmatpush.bf16.xpose.msra.mxu0 0
    %1250 = vmatpush.bf16.xpose.msra.mxu0 0
    %1251 = vmatpush.bf16.xpose.msra.mxu0 0
    %1252 = vmatpush.bf16.xpose.msra.mxu0 0
    %1253 = vmatpush.bf16.xpose.msra.mxu0 0
    %1254 = vmatpush.bf16.xpose.msra.mxu0 %v1116
    %1255 = vmatpush.bf16.xpose.msra.mxu0 %v1100
    %1256 = vmatmul.bf16.gmra.mxu0 %v987
    %v1257 = vpop.f32.mrf.mxu0
    %v1258 = vadd.f32 %v1245, %v1257
    %v1259 = vpop.f32.mrf.mxu0
    %1260 = vdwg.mxu0
    %1261 = vmatpush.bf16.xpose.msra.mxu0 0
    %1262 = vmatpush.bf16.xpose.msra.mxu0 0
    %1263 = vmatpush.bf16.xpose.msra.mxu0 0
    %1264 = vmatpush.bf16.xpose.msra.mxu0 0
    %1265 = vmatpush.bf16.xpose.msra.mxu0 0
    %1266 = vmatpush.bf16.xpose.msra.mxu0 0
    %1267 = vmatpush.bf16.xpose.msra.mxu0 %v1117
    %1268 = vmatpush.bf16.xpose.msra.mxu0 %v1101
    %1269 = vmatmul.bf16.gmra.mxu0 %v988
    %v1270 = vpop.f32.mrf.mxu0
    %v1271 = vadd.f32 %v1258, %v1270
    %v1272 = vpop.f32.mrf.mxu0
    %1273 = vdwg.mxu0
    %1274 = vmatpush.bf16.xpose.msra.mxu0 0
    %1275 = vmatpush.bf16.xpose.msra.mxu0 0
    %1276 = vmatpush.bf16.xpose.msra.mxu0 0
    %1277 = vmatpush.bf16.xpose.msra.mxu0 0
    %1278 = vmatpush.bf16.xpose.msra.mxu0 0
    %1279 = vmatpush.bf16.xpose.msra.mxu0 0
    %1280 = vmatpush.bf16.xpose.msra.mxu0 %v1118
    %1281 = vmatpush.bf16.xpose.msra.mxu0 %v1102
    %1282 = vmatmul.bf16.gmra.mxu0 %v989
    %v1283 = vpop.f32.mrf.mxu0
    %v1284 = vadd.f32 %v1271, %v1283
    %v1285 = vpop.f32.mrf.mxu0
    %1286 = vdwg.mxu0
    %1287 = vmatpush.bf16.xpose.msra.mxu0 0
    %1288 = vmatpush.bf16.xpose.msra.mxu0 0
    %1289 = vmatpush.bf16.xpose.msra.mxu0 0
    %1290 = vmatpush.bf16.xpose.msra.mxu0 0
    %1291 = vmatpush.bf16.xpose.msra.mxu0 0
    %1292 = vmatpush.bf16.xpose.msra.mxu0 0
    %1293 = vmatpush.bf16.xpose.msra.mxu0 %v1119
    %1294 = vmatpush.bf16.xpose.msra.mxu0 %v1103
    %1295 = vmatmul.bf16.gmra.mxu0 %v990
    %v1296 = vpop.f32.mrf.mxu0
    %v1297 = vadd.f32 %v1284, %v1296
    %v1298 = vpop.f32.mrf.mxu0
    %1299 = vdwg.mxu0
    %1300 = vmatpush.bf16.xpose.msra.mxu0 0
    %1301 = vmatpush.bf16.xpose.msra.mxu0 0
    %1302 = vmatpush.bf16.xpose.msra.mxu0 0
    %1303 = vmatpush.bf16.xpose.msra.mxu0 0
    %1304 = vmatpush.bf16.xpose.msra.mxu0 0
    %1305 = vmatpush.bf16.xpose.msra.mxu0 0
    %1306 = vmatpush.bf16.xpose.msra.mxu0 %v1120
    %1307 = vmatpush.bf16.xpose.msra.mxu0 %v1104
    %1308 = vmatmul.bf16.gmra.mxu0 %v991
    %v1309 = vpop.f32.mrf.mxu0
    %v1310 = vadd.f32 %v1297, %v1309
    %v1311 = vpop.f32.mrf.mxu0
    %1312 = vdwg.mxu0
    %1313 = vmatpush.bf16.xpose.msra.mxu0 0
    %1314 = vmatpush.bf16.xpose.msra.mxu0 0
    %1315 = vmatpush.bf16.xpose.msra.mxu0 0
    %1316 = vmatpush.bf16.xpose.msra.mxu0 0
    %1317 = vmatpush.bf16.xpose.msra.mxu0 0
    %1318 = vmatpush.bf16.xpose.msra.mxu0 0
    %1319 = vmatpush.bf16.xpose.msra.mxu0 %v1121
    %1320 = vmatpush.bf16.xpose.msra.mxu0 %v1105
    %1321 = vmatmul.bf16.gmra.mxu0 %v992
    %v1322 = vpop.f32.mrf.mxu0
    %v1323 = vadd.f32 %v1310, %v1322
    %v1324 = vpop.f32.mrf.mxu0
    %1325 = vdwg.mxu0
    %1326 = vmatpush.bf16.xpose.msra.mxu0 0
    %1327 = vmatpush.bf16.xpose.msra.mxu0 0
    %1328 = vmatpush.bf16.xpose.msra.mxu0 0
    %1329 = vmatpush.bf16.xpose.msra.mxu0 0
    %1330 = vmatpush.bf16.xpose.msra.mxu0 0
    %1331 = vmatpush.bf16.xpose.msra.mxu0 0
    %1332 = vmatpush.bf16.xpose.msra.mxu0 %v1122
    %1333 = vmatpush.bf16.xpose.msra.mxu0 %v1106
    %1334 = vmatmul.bf16.gmra.mxu0 %v993
    %v1335 = vpop.f32.mrf.mxu0
    %v1336 = vadd.f32 %v1323, %v1335
    %v1337 = vpop.f32.mrf.mxu0
    %1338 = vdwg.mxu0
    %1339 = vmatpush.bf16.xpose.msra.mxu0 0
    %1340 = vmatpush.bf16.xpose.msra.mxu0 0
    %1341 = vmatpush.bf16.xpose.msra.mxu0 0
    %1342 = vmatpush.bf16.xpose.msra.mxu0 0
    %1343 = vmatpush.bf16.xpose.msra.mxu0 0
    %1344 = vmatpush.bf16.xpose.msra.mxu0 0
    %1345 = vmatpush.bf16.xpose.msra.mxu0 %v1123
    %1346 = vmatpush.bf16.xpose.msra.mxu0 %v1107
    %1347 = vmatmul.bf16.gmra.mxu0 %v994
    %v1348 = vpop.f32.mrf.mxu0
    %v1349 = vadd.f32 %v1336, %v1348
    %v1350 = vpop.f32.mrf.mxu0
    %1351 = vdwg.mxu0
    %1352 = vmatpush.bf16.xpose.msra.mxu0 0
    %1353 = vmatpush.bf16.xpose.msra.mxu0 0
    %1354 = vmatpush.bf16.xpose.msra.mxu0 0
    %1355 = vmatpush.bf16.xpose.msra.mxu0 0
    %1356 = vmatpush.bf16.xpose.msra.mxu0 0
    %1357 = vmatpush.bf16.xpose.msra.mxu0 0
    %1358 = vmatpush.bf16.xpose.msra.mxu0 %v1124
    %1359 = vmatpush.bf16.xpose.msra.mxu0 %v1108
    %1360 = vmatmul.bf16.gmra.mxu0 %v995
    %v1361 = vpop.f32.mrf.mxu0
    %v1362 = vadd.f32 %v1349, %v1361
    %v1363 = vpop.f32.mrf.mxu0
    %1364 = vdwg.mxu0
    %v1365 = vadd.f32 %v557, %v1362
    %v1366 = vsel %vm325, %v1365, 0.0
    %1367 = vadd.xlane.f32.xlu0 %v1366
    %v1368 = vpop.xlane.xlu0 %1367
    %v1369 = vmul.f32 %v1368, %v534
    %v1370 = vsub.f32 %v1365, %v1369
    %v1371 = vmul.f32 %v1370, %v1370
    %v1372 = vsel %vm325, %v1371, 0.0
    %1373 = vadd.xlane.f32.xlu0 %v1372
    %v1374 = vpop.xlane.xlu0 %1373
    %v1375 = vmul.f32 %v1374, %v534
    %v1376 = vadd.f32 %v1375, 1e-05
    %v1377 = vrsqrt.pop %v1376
    %v1378 = vmul.f32 %v1377, %v1376
    %v1379 = vmul.f32 %v1378, %v1377
    %v1380 = vmul.f32 0.5, %v1379
    %v1381 = vsub.f32 1.5, %v1380
    %v1382 = vmul.f32 %v1377, %v1381
    %vm1383 = vweird.f32 %v1376
    %vm1384 = vweird.f32 %v1377
    %vm1385 = vmor %vm1383, %vm1384
    %v1386 = vsel %vm1385, %v1377, %v1382
    %v1387 = vmul.f32 %v1370, %v1386
    %v1388 = vperm.slane %v284, 2
    %v1389 = vmul.f32 %v1387, %v1388
    %v1390 = vperm.slane %v284, 3
    %v1391 = vadd.f32 %v1389, %v1390
    %v1392 = vpack.c.bf16 %v1391, %v1391
    %v1397 = vunpack.c.l.b16 %v135
    %v1398 = vunpack.c.l.b16 %v136
    %v1399 = vunpack.c.l.b16 %v137
    %v1400 = vunpack.c.l.b16 %v138
    %v1401 = vpack.c.b16 %v1398, %v1397
    %v1402 = vpack.c.b16 %v1400, %v1399
    %v1406 = vsel %vm325, %v1392, 0
    %1408 = vmatpush.bf16.msra.mxu0 0
    %1409 = vmatpush.bf16.msra.mxu0 0
    %1410 = vmatpush.bf16.msra.mxu0 0
    %1411 = vmatpush.bf16.msra.mxu0 0
    %1412 = vmatpush.bf16.msra.mxu0 0
    %1413 = vmatpush.bf16.msra.mxu0 0
    %1414 = vmatpush.bf16.msra.mxu0 %v1402
    %1415 = vmatpush.bf16.msra.mxu0 %v1401
    %1416 = vmatmul.bf16.gmra.mxu0 %v1406
    %v1417 = vpop.f32.mrf.mxu0
    %v1418 = vadd.f32 0.0, %v1417
    %v1419 = vpop.f32.mrf.mxu0
    %1420 = vdwg.mxu0
    %v1421 = vperm.slane %v284, 5
    %v1422 = vadd.f32 %v1418, %v1421
    %v1423 = vperm.slane %v284, 6
    %1425 = vrot.lane.b32.xlu0 %v1423, 32
    %v1426 = vpop.permute.xlu0 %1425
    %v1428 = vadd.f32 %v1418, %v1426
    %v1429 = vperm.slane %v284, 7
    %1431 = vrot.lane.b32.xlu0 %v1429, 64
    %v1432 = vpop.permute.xlu0 %1431
    %v1434 = vadd.f32 %v1418, %v1432
    %v1435 = vmul.f32 %v1422, 0.25
    %1437 = vrot.lane.b32.xlu0 %v1428, 96
    %v1438 = vpop.permute.xlu0 %1437
    %v1440 = vsel %vm287, %v1435, 0
    %v1442 = vsel %vm287, %v1438, 0
    %1444 = vmatpush.xpose.msra.mxu0 0.0
    %1445 = vmatpush.xpose.msra.mxu0 0.0
    %1446 = vmatpush.xpose.msra.mxu0 0.0
    %1447 = vmatpush.xpose.msra.mxu0 0.0
    %1448 = vmatpush.xpose.msra.mxu0 0.0
    %1449 = vmatpush.xpose.msra.mxu0 0.0
    %1450 = vmatpush.xpose.msra.mxu0 0.0
    %1451 = vmatpush.xpose.msra.mxu0 0.0
    %1452 = vmatpush.xpose.msra.mxu0 0.0
    %1453 = vmatpush.xpose.msra.mxu0 0.0
    %1454 = vmatpush.xpose.msra.mxu0 0.0
    %1455 = vmatpush.xpose.msra.mxu0 0.0
    %1456 = vmatpush.xpose.msra.mxu0 0.0
    %1457 = vmatpush.xpose.msra.mxu0 0.0
    %1458 = vmatpush.xpose.msra.mxu0 0.0
    %1459 = vmatpush.xpose.msra.mxu0 %v1442
    %1460 = vmatmul.f32.gmra.mxu0 %v1440
    %v1461 = vpop.f32.mrf.mxu0
    %v1462 = vadd.f32 0.0, %v1461
    %1463 = vdwg.mxu0
    %v1464 = vsel %vm385, %v1462, -inf
    %1465 = vmax.xlane.f32.xlu0 %v1464
    %v1466 = vpop.xlane.xlu0 %1465
    %v1467 = vsub.f32 %v1462, %v1466
    %v1468 = vmul.f32 %v1467, 1.442695
    %v1469 = vpow.pop %v1468
    %v1470 = vsel %vm385, %v1469, 0.0
    %1471 = vadd.xlane.f32.xlu0 %v1470
    %v1472 = vpop.xlane.xlu0 %1471
    %v1473 = vrcp.pop %v1472
    %v1474 = vmul.f32 %v1469, %v1473
    %1476 = vrot.lane.b32.xlu0 %v1434, 64
    %v1477 = vpop.permute.xlu0 %1476
    %v1480 = vsel %vm385, %v1474, 0
    %1482 = vmatpush.msra.mxu0 0.0
    %1483 = vmatpush.msra.mxu0 0.0
    %1484 = vmatpush.msra.mxu0 0.0
    %1485 = vmatpush.msra.mxu0 0.0
    %1486 = vmatpush.msra.mxu0 0.0
    %1487 = vmatpush.msra.mxu0 0.0
    %1488 = vmatpush.msra.mxu0 0.0
    %1489 = vmatpush.msra.mxu0 0.0
    %1490 = vmatpush.msra.mxu0 0.0
    %1491 = vmatpush.msra.mxu0 0.0
    %1492 = vmatpush.msra.mxu0 0.0
    %1493 = vmatpush.msra.mxu0 0.0
    %1494 = vmatpush.msra.mxu0 0.0
    %1495 = vmatpush.msra.mxu0 0.0
    %1496 = vmatpush.msra.mxu0 0.0
    %1497 = vmatpush.msra.mxu0 %v1477
    %1498 = vmatmul.f32.gmra.mxu0 %v1480
    %v1499 = vpop.f32.mrf.mxu0
    %v1500 = vadd.f32 0.0, %v1499
    %1501 = vdwg.mxu0
    %1502 = vrot.lane.b32.xlu0 %v1435, 112
    %v1503 = vpop.permute.xlu0 %1502
    %1504 = vrot.lane.b32.xlu0 %v1428, 80
    %v1505 = vpop.permute.xlu0 %1504
    %v1506 = vsel %vm287, %v1503, 0
    %v1508 = vsel %vm287, %v1505, 0
    %1510 = vmatpush.xpose.msra.mxu0 0.0
    %1511 = vmatpush.xpose.msra.mxu0 0.0
    %1512 = vmatpush.xpose.msra.mxu0 0.0
    %1513 = vmatpush.xpose.msra.mxu0 0.0
    %1514 = vmatpush.xpose.msra.mxu0 0.0
    %1515 = vmatpush.xpose.msra.mxu0 0.0
    %1516 = vmatpush.xpose.msra.mxu0 0.0
    %1517 = vmatpush.xpose.msra.mxu0 0.0
    %1518 = vmatpush.xpose.msra.mxu0 0.0
    %1519 = vmatpush.xpose.msra.mxu0 0.0
    %1520 = vmatpush.xpose.msra.mxu0 0.0
    %1521 = vmatpush.xpose.msra.mxu0 0.0
    %1522 = vmatpush.xpose.msra.mxu0 0.0
    %1523 = vmatpush.xpose.msra.mxu0 0.0
    %1524 = vmatpush.xpose.msra.mxu0 0.0
    %1525 = vmatpush.xpose.msra.mxu0 %v1508
    %1526 = vmatmul.f32.gmra.mxu0 %v1506
    %v1527 = vpop.f32.mrf.mxu0
    %v1528 = vadd.f32 0.0, %v1527
    %1529 = vdwg.mxu0
    %v1530 = vsel %vm385, %v1528, -inf
    %1531 = vmax.xlane.f32.xlu0 %v1530
    %v1532 = vpop.xlane.xlu0 %1531
    %v1533 = vsub.f32 %v1528, %v1532
    %v1534 = vmul.f32 %v1533, 1.442695
    %v1535 = vpow.pop %v1534
    %v1536 = vsel %vm385, %v1535, 0.0
    %1537 = vadd.xlane.f32.xlu0 %v1536
    %v1538 = vpop.xlane.xlu0 %1537
    %v1539 = vrcp.pop %v1538
    %v1540 = vmul.f32 %v1535, %v1539
    %1541 = vrot.lane.b32.xlu0 %v1434, 48
    %v1542 = vpop.permute.xlu0 %1541
    %v1545 = vsel %vm385, %v1540, 0
    %1547 = vmatpush.msra.mxu0 0.0
    %1548 = vmatpush.msra.mxu0 0.0
    %1549 = vmatpush.msra.mxu0 0.0
    %1550 = vmatpush.msra.mxu0 0.0
    %1551 = vmatpush.msra.mxu0 0.0
    %1552 = vmatpush.msra.mxu0 0.0
    %1553 = vmatpush.msra.mxu0 0.0
    %1554 = vmatpush.msra.mxu0 0.0
    %1555 = vmatpush.msra.mxu0 0.0
    %1556 = vmatpush.msra.mxu0 0.0
    %1557 = vmatpush.msra.mxu0 0.0
    %1558 = vmatpush.msra.mxu0 0.0
    %1559 = vmatpush.msra.mxu0 0.0
    %1560 = vmatpush.msra.mxu0 0.0
    %1561 = vmatpush.msra.mxu0 0.0
    %1562 = vmatpush.msra.mxu0 %v1542
    %1563 = vmatmul.f32.gmra.mxu0 %v1545
    %v1564 = vpop.f32.mrf.mxu0
    %v1565 = vadd.f32 0.0, %v1564
    %1566 = vdwg.mxu0
    %1568 = vrot.lane.b32.xlu0 %v1565, 16
    %v1569 = vpop.permute.xlu0 %1568
    %v1571 = vsel %vm287, %v1500, %v1569
    %v1572 = vpack.c.bf16 %v1571, %v1571
    %v1573 = vperm.slane %v285, 0
    %v1578 = vunpack.c.l.b16 %v143
    %v1579 = vunpack.c.l.b16 %v144
    %v1580 = vunpack.c.l.b16 %v145
    %v1581 = vunpack.c.l.b16 %v146
    %v1582 = vpack.c.b16 %v1579, %v1578
    %v1583 = vpack.c.b16 %v1581, %v1580
    %v1587 = vsel %vm325, %v1572, 0
    %1589 = vmatpush.bf16.msra.mxu0 0
    %1590 = vmatpush.bf16.msra.mxu0 0
    %1591 = vmatpush.bf16.msra.mxu0 0
    %1592 = vmatpush.bf16.msra.mxu0 0
    %1593 = vmatpush.bf16.msra.mxu0 0
    %1594 = vmatpush.bf16.msra.mxu0 0
    %1595 = vmatpush.bf16.msra.mxu0 %v1583
    %1596 = vmatpush.bf16.msra.mxu0 %v1582
    %1597 = vmatmul.bf16.gmra.mxu0 %v1587
    %v1598 = vpop.f32.mrf.mxu0
    %v1599 = vadd.f32 %v1573, %v1598
    %v1600 = vpop.f32.mrf.mxu0
    %1601 = vdwg.mxu0
    %v1602 = vadd.f32 %v1391, %v1599
    %v1603 = vsel %vm325, %v1602, 0.0
    %1604 = vadd.xlane.f32.xlu0 %v1603
    %v1605 = vpop.xlane.xlu0 %1604
    %v1606 = vmul.f32 %v1605, %v534
    %v1607 = vsub.f32 %v1602, %v1606
    %v1608 = vmul.f32 %v1607, %v1607
    %v1609 = vsel %vm325, %v1608, 0.0
    %1610 = vadd.xlane.f32.xlu0 %v1609
    %v1611 = vpop.xlane.xlu0 %1610
    %v1612 = vmul.f32 %v1611, %v534
    %v1613 = vadd.f32 %v1612, 1e-05
    %v1614 = vrsqrt.pop %v1613
    %v1615 = vmul.f32 %v1614, %v1613
    %v1616 = vmul.f32 %v1615, %v1614
    %v1617 = vmul.f32 0.5, %v1616
    %v1618 = vsub.f32 1.5, %v1617
    %v1619 = vmul.f32 %v1614, %v1618
    %vm1620 = vweird.f32 %v1613
    %vm1621 = vweird.f32 %v1614
    %vm1622 = vmor %vm1620, %vm1621
    %v1623 = vsel %vm1622, %v1614, %v1619
    %v1624 = vmul.f32 %v1607, %v1623
    %v1625 = vperm.slane %v285, 1
    %v1626 = vmul.f32 %v1624, %v1625
    %v1627 = vperm.slane %v285, 2
    %v1628 = vadd.f32 %v1626, %v1627
    %v1629 = vpack.c.bf16 %v1628, %v1628
    %v1632 = vperm.slane %v213, 0
    %v1633 = vperm.slane %v213, 1
    %v1634 = vperm.slane %v213, 2
    %v1635 = vperm.slane %v213, 3
    %v1636 = vperm.slane %v213, 4
    %v1637 = vperm.slane %v213, 5
    %v1638 = vperm.slane %v213, 6
    %v1639 = vperm.slane %v213, 7
    %v1640 = vperm.slane %v214, 0
    %v1641 = vperm.slane %v214, 1
    %v1642 = vperm.slane %v214, 2
    %v1643 = vperm.slane %v214, 3
    %v1644 = vperm.slane %v214, 4
    %v1645 = vperm.slane %v214, 5
    %v1646 = vperm.slane %v214, 6
    %v1647 = vperm.slane %v214, 7
    %v1696 = vunpack.c.l.b16 %v179
    %v1697 = vunpack.c.h.b16 %v179
    %v1698 = vunpack.c.l.b16 %v180
    %v1699 = vunpack.c.h.b16 %v180
    %v1700 = vunpack.c.l.b16 %v181
    %v1701 = vunpack.c.h.b16 %v181
    %v1702 = vunpack.c.l.b16 %v182
    %v1703 = vunpack.c.h.b16 %v182
    %v1704 = vunpack.c.l.b16 %v183
    %v1705 = vunpack.c.h.b16 %v183
    %v1706 = vunpack.c.l.b16 %v184
    %v1707 = vunpack.c.h.b16 %v184
    %v1708 = vunpack.c.l.b16 %v185
    %v1709 = vunpack.c.h.b16 %v185
    %v1710 = vunpack.c.l.b16 %v186
    %v1711 = vunpack.c.h.b16 %v186
    %v1712 = vunpack.c.l.b16 %v187
    %v1713 = vunpack.c.h.b16 %v187
    %v1714 = vunpack.c.l.b16 %v188
    %v1715 = vunpack.c.h.b16 %v188
    %v1716 = vunpack.c.l.b16 %v189
    %v1717 = vunpack.c.h.b16 %v189
    %v1718 = vunpack.c.l.b16 %v190
    %v1719 = vunpack.c.h.b16 %v190
    %v1720 = vunpack.c.l.b16 %v191
    %v1721 = vunpack.c.h.b16 %v191
    %v1722 = vunpack.c.l.b16 %v192
    %v1723 = vunpack.c.h.b16 %v192
    %v1724 = vunpack.c.l.b16 %v193
    %v1725 = vunpack.c.h.b16 %v193
    %v1726 = vunpack.c.l.b16 %v194
    %v1727 = vunpack.c.h.b16 %v194
    %v1728 = vunpack.c.l.b16 %v195
    %v1729 = vunpack.c.h.b16 %v195
    %v1730 = vunpack.c.l.b16 %v196
    %v1731 = vunpack.c.h.b16 %v196
    %v1732 = vunpack.c.l.b16 %v197
    %v1733 = vunpack.c.h.b16 %v197
    %v1734 = vunpack.c.l.b16 %v198
    %v1735 = vunpack.c.h.b16 %v198
    %v1736 = vunpack.c.l.b16 %v199
    %v1737 = vunpack.c.h.b16 %v199
    %v1738 = vunpack.c.l.b16 %v200
    %v1739 = vunpack.c.h.b16 %v200
    %v1740 = vunpack.c.l.b16 %v201
    %v1741 = vunpack.c.h.b16 %v201
    %v1742 = vunpack.c.l.b16 %v202
    %v1743 = vunpack.c.h.b16 %v202
    %v1744 = vunpack.c.l.b16 %v203
    %v1745 = vunpack.c.h.b16 %v203
    %v1746 = vunpack.c.l.b16 %v204
    %v1747 = vunpack.c.h.b16 %v204
    %v1748 = vunpack.c.l.b16 %v205
    %v1749 = vunpack.c.h.b16 %v205
    %v1750 = vunpack.c.l.b16 %v206
    %v1751 = vunpack.c.h.b16 %v206
    %v1752 = vunpack.c.l.b16 %v207
    %v1753 = vunpack.c.h.b16 %v207
    %v1754 = vunpack.c.l.b16 %v208
    %v1755 = vunpack.c.h.b16 %v208
    %v1756 = vunpack.c.l.b16 %v209
    %v1757 = vunpack.c.h.b16 %v209
    %v1758 = vunpack.c.l.b16 %v210
    %v1759 = vunpack.c.h.b16 %v210
    %v1760 = vpack.c.b16 %v1712, %v1696
    %v1761 = vpack.c.b16 %v1713, %v1697
    %v1762 = vpack.c.b16 %v1714, %v1698
    %v1763 = vpack.c.b16 %v1715, %v1699
    %v1764 = vpack.c.b16 %v1716, %v1700
    %v1765 = vpack.c.b16 %v1717, %v1701
    %v1766 = vpack.c.b16 %v1718, %v1702
    %v1767 = vpack.c.b16 %v1719, %v1703
    %v1768 = vpack.c.b16 %v1720, %v1704
    %v1769 = vpack.c.b16 %v1721, %v1705
    %v1770 = vpack.c.b16 %v1722, %v1706
    %v1771 = vpack.c.b16 %v1723, %v1707
    %v1772 = vpack.c.b16 %v1724, %v1708
    %v1773 = vpack.c.b16 %v1725, %v1709
    %v1774 = vpack.c.b16 %v1726, %v1710
    %v1775 = vpack.c.b16 %v1727, %v1711
    %v1776 = vpack.c.b16 %v1744, %v1728
    %v1777 = vpack.c.b16 %v1745, %v1729
    %v1778 = vpack.c.b16 %v1746, %v1730
    %v1779 = vpack.c.b16 %v1747, %v1731
    %v1780 = vpack.c.b16 %v1748, %v1732
    %v1781 = vpack.c.b16 %v1749, %v1733
    %v1782 = vpack.c.b16 %v1750, %v1734
    %v1783 = vpack.c.b16 %v1751, %v1735
    %v1784 = vpack.c.b16 %v1752, %v1736
    %v1785 = vpack.c.b16 %v1753, %v1737
    %v1786 = vpack.c.b16 %v1754, %v1738
    %v1787 = vpack.c.b16 %v1755, %v1739
    %v1788 = vpack.c.b16 %v1756, %v1740
    %v1789 = vpack.c.b16 %v1757, %v1741
    %v1790 = vpack.c.b16 %v1758, %v1742
    %v1791 = vpack.c.b16 %v1759, %v1743
    %v1825 = vsel %vm325, %v1629, 0
    %1827 = vmatpush.bf16.msra.mxu0 0
    %1828 = vmatpush.bf16.msra.mxu0 0
    %1829 = vmatpush.bf16.msra.mxu0 0
    %1830 = vmatpush.bf16.msra.mxu0 0
    %1831 = vmatpush.bf16.msra.mxu0 0
    %1832 = vmatpush.bf16.msra.mxu0 0
    %1833 = vmatpush.bf16.msra.mxu0 %v1776
    %1834 = vmatpush.bf16.msra.mxu0 %v1760
    %1835 = vmatmul.bf16.gmra.mxu0 %v1825
    %v1836 = vpop.f32.mrf.mxu0
    %v1837 = vadd.f32 %v1632, %v1836
    %v1838 = vpop.f32.mrf.mxu0
    %1839 = vdwg.mxu0
    %1840 = vmatpush.bf16.msra.mxu0 0
    %1841 = vmatpush.bf16.msra.mxu0 0
    %1842 = vmatpush.bf16.msra.mxu0 0
    %1843 = vmatpush.bf16.msra.mxu0 0
    %1844 = vmatpush.bf16.msra.mxu0 0
    %1845 = vmatpush.bf16.msra.mxu0 0
    %1846 = vmatpush.bf16.msra.mxu0 %v1777
    %1847 = vmatpush.bf16.msra.mxu0 %v1761
    %1848 = vmatmul.bf16.gmra.mxu0 %v1825
    %v1849 = vpop.f32.mrf.mxu0
    %v1850 = vadd.f32 %v1633, %v1849
    %v1851 = vpop.f32.mrf.mxu0
    %1852 = vdwg.mxu0
    %1853 = vmatpush.bf16.msra.mxu0 0
    %1854 = vmatpush.bf16.msra.mxu0 0
    %1855 = vmatpush.bf16.msra.mxu0 0
    %1856 = vmatpush.bf16.msra.mxu0 0
    %1857 = vmatpush.bf16.msra.mxu0 0
    %1858 = vmatpush.bf16.msra.mxu0 0
    %1859 = vmatpush.bf16.msra.mxu0 %v1778
    %1860 = vmatpush.bf16.msra.mxu0 %v1762
    %1861 = vmatmul.bf16.gmra.mxu0 %v1825
    %v1862 = vpop.f32.mrf.mxu0
    %v1863 = vadd.f32 %v1634, %v1862
    %v1864 = vpop.f32.mrf.mxu0
    %1865 = vdwg.mxu0
    %1866 = vmatpush.bf16.msra.mxu0 0
    %1867 = vmatpush.bf16.msra.mxu0 0
    %1868 = vmatpush.bf16.msra.mxu0 0
    %1869 = vmatpush.bf16.msra.mxu0 0
    %1870 = vmatpush.bf16.msra.mxu0 0
    %1871 = vmatpush.bf16.msra.mxu0 0
    %1872 = vmatpush.bf16.msra.mxu0 %v1779
    %1873 = vmatpush.bf16.msra.mxu0 %v1763
    %1874 = vmatmul.bf16.gmra.mxu0 %v1825
    %v1875 = vpop.f32.mrf.mxu0
    %v1876 = vadd.f32 %v1635, %v1875
    %v1877 = vpop.f32.mrf.mxu0
    %1878 = vdwg.mxu0
    %1879 = vmatpush.bf16.msra.mxu0 0
    %1880 = vmatpush.bf16.msra.mxu0 0
    %1881 = vmatpush.bf16.msra.mxu0 0
    %1882 = vmatpush.bf16.msra.mxu0 0
    %1883 = vmatpush.bf16.msra.mxu0 0
    %1884 = vmatpush.bf16.msra.mxu0 0
    %1885 = vmatpush.bf16.msra.mxu0 %v1780
    %1886 = vmatpush.bf16.msra.mxu0 %v1764
    %1887 = vmatmul.bf16.gmra.mxu0 %v1825
    %v1888 = vpop.f32.mrf.mxu0
    %v1889 = vadd.f32 %v1636, %v1888
    %v1890 = vpop.f32.mrf.mxu0
    %1891 = vdwg.mxu0
    %1892 = vmatpush.bf16.msra.mxu0 0
    %1893 = vmatpush.bf16.msra.mxu0 0
    %1894 = vmatpush.bf16.msra.mxu0 0
    %1895 = vmatpush.bf16.msra.mxu0 0
    %1896 = vmatpush.bf16.msra.mxu0 0
    %1897 = vmatpush.bf16.msra.mxu0 0
    %1898 = vmatpush.bf16.msra.mxu0 %v1781
    %1899 = vmatpush.bf16.msra.mxu0 %v1765
    %1900 = vmatmul.bf16.gmra.mxu0 %v1825
    %v1901 = vpop.f32.mrf.mxu0
    %v1902 = vadd.f32 %v1637, %v1901
    %v1903 = vpop.f32.mrf.mxu0
    %1904 = vdwg.mxu0
    %1905 = vmatpush.bf16.msra.mxu0 0
    %1906 = vmatpush.bf16.msra.mxu0 0
    %1907 = vmatpush.bf16.msra.mxu0 0
    %1908 = vmatpush.bf16.msra.mxu0 0
    %1909 = vmatpush.bf16.msra.mxu0 0
    %1910 = vmatpush.bf16.msra.mxu0 0
    %1911 = vmatpush.bf16.msra.mxu0 %v1782
    %1912 = vmatpush.bf16.msra.mxu0 %v1766
    %1913 = vmatmul.bf16.gmra.mxu0 %v1825
    %v1914 = vpop.f32.mrf.mxu0
    %v1915 = vadd.f32 %v1638, %v1914
    %v1916 = vpop.f32.mrf.mxu0
    %1917 = vdwg.mxu0
    %1918 = vmatpush.bf16.msra.mxu0 0
    %1919 = vmatpush.bf16.msra.mxu0 0
    %1920 = vmatpush.bf16.msra.mxu0 0
    %1921 = vmatpush.bf16.msra.mxu0 0
    %1922 = vmatpush.bf16.msra.mxu0 0
    %1923 = vmatpush.bf16.msra.mxu0 0
    %1924 = vmatpush.bf16.msra.mxu0 %v1783
    %1925 = vmatpush.bf16.msra.mxu0 %v1767
    %1926 = vmatmul.bf16.gmra.mxu0 %v1825
    %v1927 = vpop.f32.mrf.mxu0
    %v1928 = vadd.f32 %v1639, %v1927
    %v1929 = vpop.f32.mrf.mxu0
    %1930 = vdwg.mxu0
    %1931 = vmatpush.bf16.msra.mxu0 0
    %1932 = vmatpush.bf16.msra.mxu0 0
    %1933 = vmatpush.bf16.msra.mxu0 0
    %1934 = vmatpush.bf16.msra.mxu0 0
    %1935 = vmatpush.bf16.msra.mxu0 0
    %1936 = vmatpush.bf16.msra.mxu0 0
    %1937 = vmatpush.bf16.msra.mxu0 %v1784
    %1938 = vmatpush.bf16.msra.mxu0 %v1768
    %1939 = vmatmul.bf16.gmra.mxu0 %v1825
    %v1940 = vpop.f32.mrf.mxu0
    %v1941 = vadd.f32 %v1640, %v1940
    %v1942 = vpop.f32.mrf.mxu0
    %1943 = vdwg.mxu0
    %1944 = vmatpush.bf16.msra.mxu0 0
    %1945 = vmatpush.bf16.msra.mxu0 0
    %1946 = vmatpush.bf16.msra.mxu0 0
    %1947 = vmatpush.bf16.msra.mxu0 0
    %1948 = vmatpush.bf16.msra.mxu0 0
    %1949 = vmatpush.bf16.msra.mxu0 0
    %1950 = vmatpush.bf16.msra.mxu0 %v1785
    %1951 = vmatpush.bf16.msra.mxu0 %v1769
    %1952 = vmatmul.bf16.gmra.mxu0 %v1825
    %v1953 = vpop.f32.mrf.mxu0
    %v1954 = vadd.f32 %v1641, %v1953
    %v1955 = vpop.f32.mrf.mxu0
    %1956 = vdwg.mxu0
    %1957 = vmatpush.bf16.msra.mxu0 0
    %1958 = vmatpush.bf16.msra.mxu0 0
    %1959 = vmatpush.bf16.msra.mxu0 0
    %1960 = vmatpush.bf16.msra.mxu0 0
    %1961 = vmatpush.bf16.msra.mxu0 0
    %1962 = vmatpush.bf16.msra.mxu0 0
    %1963 = vmatpush.bf16.msra.mxu0 %v1786
    %1964 = vmatpush.bf16.msra.mxu0 %v1770
    %1965 = vmatmul.bf16.gmra.mxu0 %v1825
    %v1966 = vpop.f32.mrf.mxu0
    %v1967 = vadd.f32 %v1642, %v1966
    %v1968 = vpop.f32.mrf.mxu0
    %1969 = vdwg.mxu0
    %1970 = vmatpush.bf16.msra.mxu0 0
    %1971 = vmatpush.bf16.msra.mxu0 0
    %1972 = vmatpush.bf16.msra.mxu0 0
    %1973 = vmatpush.bf16.msra.mxu0 0
    %1974 = vmatpush.bf16.msra.mxu0 0
    %1975 = vmatpush.bf16.msra.mxu0 0
    %1976 = vmatpush.bf16.msra.mxu0 %v1787
    %1977 = vmatpush.bf16.msra.mxu0 %v1771
    %1978 = vmatmul.bf16.gmra.mxu0 %v1825
    %v1979 = vpop.f32.mrf.mxu0
    %v1980 = vadd.f32 %v1643, %v1979
    %v1981 = vpop.f32.mrf.mxu0
    %1982 = vdwg.mxu0
    %1983 = vmatpush.bf16.msra.mxu0 0
    %1984 = vmatpush.bf16.msra.mxu0 0
    %1985 = vmatpush.bf16.msra.mxu0 0
    %1986 = vmatpush.bf16.msra.mxu0 0
    %1987 = vmatpush.bf16.msra.mxu0 0
    %1988 = vmatpush.bf16.msra.mxu0 0
    %1989 = vmatpush.bf16.msra.mxu0 %v1788
    %1990 = vmatpush.bf16.msra.mxu0 %v1772
    %1991 = vmatmul.bf16.gmra.mxu0 %v1825
    %v1992 = vpop.f32.mrf.mxu0
    %v1993 = vadd.f32 %v1644, %v1992
    %v1994 = vpop.f32.mrf.mxu0
    %1995 = vdwg.mxu0
    %1996 = vmatpush.bf16.msra.mxu0 0
    %1997 = vmatpush.bf16.msra.mxu0 0
    %1998 = vmatpush.bf16.msra.mxu0 0
    %1999 = vmatpush.bf16.msra.mxu0 0
    %2000 = vmatpush.bf16.msra.mxu0 0
    %2001 = vmatpush.bf16.msra.mxu0 0
    %2002 = vmatpush.bf16.msra.mxu0 %v1789
    %2003 = vmatpush.bf16.msra.mxu0 %v1773
    %2004 = vmatmul.bf16.gmra.mxu0 %v1825
    %v2005 = vpop.f32.mrf.mxu0
    %v2006 = vadd.f32 %v1645, %v2005
    %v2007 = vpop.f32.mrf.mxu0
    %2008 = vdwg.mxu0
    %2009 = vmatpush.bf16.msra.mxu0 0
    %2010 = vmatpush.bf16.msra.mxu0 0
    %2011 = vmatpush.bf16.msra.mxu0 0
    %2012 = vmatpush.bf16.msra.mxu0 0
    %2013 = vmatpush.bf16.msra.mxu0 0
    %2014 = vmatpush.bf16.msra.mxu0 0
    %2015 = vmatpush.bf16.msra.mxu0 %v1790
    %2016 = vmatpush.bf16.msra.mxu0 %v1774
    %2017 = vmatmul.bf16.gmra.mxu0 %v1825
    %v2018 = vpop.f32.mrf.mxu0
    %v2019 = vadd.f32 %v1646, %v2018
    %v2020 = vpop.f32.mrf.mxu0
    %2021 = vdwg.mxu0
    %2022 = vmatpush.bf16.msra.mxu0 0
    %2023 = vmatpush.bf16.msra.mxu0 0
    %2024 = vmatpush.bf16.msra.mxu0 0
    %2025 = vmatpush.bf16.msra.mxu0 0
    %2026 = vmatpush.bf16.msra.mxu0 0
    %2027 = vmatpush.bf16.msra.mxu0 0
    %2028 = vmatpush.bf16.msra.mxu0 %v1791
    %2029 = vmatpush.bf16.msra.mxu0 %v1775
    %2030 = vmatmul.bf16.gmra.mxu0 %v1825
    %v2031 = vpop.f32.mrf.mxu0
    %v2032 = vadd.f32 %v1647, %v2031
    %v2033 = vpop.f32.mrf.mxu0
    %2034 = vdwg.mxu0
    %v2035 = vmax.f32 %v1837, 0.0
    %v2036 = vmax.f32 %v1850, 0.0
    %v2037 = vmax.f32 %v1863, 0.0
    %v2038 = vmax.f32 %v1876, 0.0
    %v2039 = vmax.f32 %v1889, 0.0
    %v2040 = vmax.f32 %v1902, 0.0
    %v2041 = vmax.f32 %v1915, 0.0
    %v2042 = vmax.f32 %v1928, 0.0
    %v2043 = vmax.f32 %v1941, 0.0
    %v2044 = vmax.f32 %v1954, 0.0
    %v2045 = vmax.f32 %v1967, 0.0
    %v2046 = vmax.f32 %v1980, 0.0
    %v2047 = vmax.f32 %v1993, 0.0
    %v2048 = vmax.f32 %v2006, 0.0
    %v2049 = vmax.f32 %v2019, 0.0
    %v2050 = vmax.f32 %v2032, 0.0
    %v2051 = vpack.c.bf16 %v2035, %v2035
    %v2052 = vpack.c.bf16 %v2036, %v2036
    %v2053 = vpack.c.bf16 %v2037, %v2037
    %v2054 = vpack.c.bf16 %v2038, %v2038
    %v2055 = vpack.c.bf16 %v2039, %v2039
    %v2056 = vpack.c.bf16 %v2040, %v2040
    %v2057 = vpack.c.bf16 %v2041, %v2041
    %v2058 = vpack.c.bf16 %v2042, %v2042
    %v2059 = vpack.c.bf16 %v2043, %v2043
    %v2060 = vpack.c.bf16 %v2044, %v2044
    %v2061 = vpack.c.bf16 %v2045, %v2045
    %v2062 = vpack.c.bf16 %v2046, %v2046
    %v2063 = vpack.c.bf16 %v2047, %v2047
    %v2064 = vpack.c.bf16 %v2048, %v2048
    %v2065 = vpack.c.bf16 %v2049, %v2049
    %v2066 = vpack.c.bf16 %v2050, %v2050
    %v2067 = vperm.slane %v285, 5
    %v2100 = vunpack.c.l.b16 %v247
    %v2101 = vunpack.c.h.b16 %v247
    %v2102 = vunpack.c.l.b16 %v248
    %v2103 = vunpack.c.h.b16 %v248
    %v2104 = vunpack.c.l.b16 %v249
    %v2105 = vunpack.c.h.b16 %v249
    %v2106 = vunpack.c.l.b16 %v250
    %v2107 = vunpack.c.h.b16 %v250
    %v2108 = vunpack.c.l.b16 %v251
    %v2109 = vunpack.c.h.b16 %v251
    %v2110 = vunpack.c.l.b16 %v252
    %v2111 = vunpack.c.h.b16 %v252
    %v2112 = vunpack.c.l.b16 %v253
    %v2113 = vunpack.c.h.b16 %v253
    %v2114 = vunpack.c.l.b16 %v254
    %v2115 = vunpack.c.h.b16 %v254
    %v2116 = vunpack.c.l.b16 %v255
    %v2117 = vunpack.c.h.b16 %v255
    %v2118 = vunpack.c.l.b16 %v256
    %v2119 = vunpack.c.h.b16 %v256
    %v2120 = vunpack.c.l.b16 %v257
    %v2121 = vunpack.c.h.b16 %v257
    %v2122 = vunpack.c.l.b16 %v258
    %v2123 = vunpack.c.h.b16 %v258
    %v2124 = vunpack.c.l.b16 %v259
    %v2125 = vunpack.c.h.b16 %v259
    %v2126 = vunpack.c.l.b16 %v260
    %v2127 = vunpack.c.h.b16 %v260
    %v2128 = vunpack.c.l.b16 %v261
    %v2129 = vunpack.c.h.b16 %v261
    %v2130 = vunpack.c.l.b16 %v262
    %v2131 = vunpack.c.h.b16 %v262
    %v2132 = vunpack.c.l.b16 %v263
    %v2133 = vunpack.c.h.b16 %v263
    %v2134 = vunpack.c.l.b16 %v264
    %v2135 = vunpack.c.h.b16 %v264
    %v2136 = vunpack.c.l.b16 %v265
    %v2137 = vunpack.c.h.b16 %v265
    %v2138 = vunpack.c.l.b16 %v266
    %v2139 = vunpack.c.h.b16 %v266
    %v2140 = vunpack.c.l.b16 %v267
    %v2141 = vunpack.c.h.b16 %v267
    %v2142 = vunpack.c.l.b16 %v268
    %v2143 = vunpack.c.h.b16 %v268
    %v2144 = vunpack.c.l.b16 %v269
    %v2145 = vunpack.c.h.b16 %v269
    %v2146 = vunpack.c.l.b16 %v270
    %v2147 = vunpack.c.h.b16 %v270
    %v2148 = vunpack.c.l.b16 %v271
    %v2149 = vunpack.c.h.b16 %v271
    %v2150 = vunpack.c.l.b16 %v272
    %v2151 = vunpack.c.h.b16 %v272
    %v2152 = vunpack.c.l.b16 %v273
    %v2153 = vunpack.c.h.b16 %v273
    %v2154 = vunpack.c.l.b16 %v274
    %v2155 = vunpack.c.h.b16 %v274
    %v2156 = vunpack.c.l.b16 %v275
    %v2157 = vunpack.c.h.b16 %v275
    %v2158 = vunpack.c.l.b16 %v276
    %v2159 = vunpack.c.h.b16 %v276
    %v2160 = vunpack.c.l.b16 %v277
    %v2161 = vunpack.c.h.b16 %v277
    %v2162 = vunpack.c.l.b16 %v278
    %v2163 = vunpack.c.h.b16 %v278
    %v2164 = vpack.c.b16 %v2116, %v2100
    %v2165 = vpack.c.b16 %v2117, %v2101
    %v2166 = vpack.c.b16 %v2118, %v2102
    %v2167 = vpack.c.b16 %v2119, %v2103
    %v2168 = vpack.c.b16 %v2120, %v2104
    %v2169 = vpack.c.b16 %v2121, %v2105
    %v2170 = vpack.c.b16 %v2122, %v2106
    %v2171 = vpack.c.b16 %v2123, %v2107
    %v2172 = vpack.c.b16 %v2124, %v2108
    %v2173 = vpack.c.b16 %v2125, %v2109
    %v2174 = vpack.c.b16 %v2126, %v2110
    %v2175 = vpack.c.b16 %v2127, %v2111
    %v2176 = vpack.c.b16 %v2128, %v2112
    %v2177 = vpack.c.b16 %v2129, %v2113
    %v2178 = vpack.c.b16 %v2130, %v2114
    %v2179 = vpack.c.b16 %v2131, %v2115
    %v2180 = vpack.c.b16 %v2148, %v2132
    %v2181 = vpack.c.b16 %v2149, %v2133
    %v2182 = vpack.c.b16 %v2150, %v2134
    %v2183 = vpack.c.b16 %v2151, %v2135
    %v2184 = vpack.c.b16 %v2152, %v2136
    %v2185 = vpack.c.b16 %v2153, %v2137
    %v2186 = vpack.c.b16 %v2154, %v2138
    %v2187 = vpack.c.b16 %v2155, %v2139
    %v2188 = vpack.c.b16 %v2156, %v2140
    %v2189 = vpack.c.b16 %v2157, %v2141
    %v2190 = vpack.c.b16 %v2158, %v2142
    %v2191 = vpack.c.b16 %v2159, %v2143
    %v2192 = vpack.c.b16 %v2160, %v2144
    %v2193 = vpack.c.b16 %v2161, %v2145
    %v2194 = vpack.c.b16 %v2162, %v2146
    %v2195 = vpack.c.b16 %v2163, %v2147
    %2228 = vmatpush.bf16.xpose.msra.mxu0 0
    %2229 = vmatpush.bf16.xpose.msra.mxu0 0
    %2230 = vmatpush.bf16.xpose.msra.mxu0 0
    %2231 = vmatpush.bf16.xpose.msra.mxu0 0
    %2232 = vmatpush.bf16.xpose.msra.mxu0 0
    %2233 = vmatpush.bf16.xpose.msra.mxu0 0
    %2234 = vmatpush.bf16.xpose.msra.mxu0 %v2180
    %2235 = vmatpush.bf16.xpose.msra.mxu0 %v2164
    %2236 = vmatmul.bf16.gmra.mxu0 %v2051
    %v2237 = vpop.f32.mrf.mxu0
    %v2238 = vadd.f32 %v2067, %v2237
    %v2239 = vpop.f32.mrf.mxu0
    %2240 = vdwg.mxu0
    %2241 = vmatpush.bf16.xpose.msra.mxu0 0
    %2242 = vmatpush.bf16.xpose.msra.mxu0 0
    %2243 = vmatpush.bf16.xpose.msra.mxu0 0
    %2244 = vmatpush.bf16.xpose.msra.mxu0 0
    %2245 = vmatpush.bf16.xpose.msra.mxu0 0
    %2246 = vmatpush.bf16.xpose.msra.mxu0 0
    %2247 = vmatpush.bf16.xpose.msra.mxu0 %v2181
    %2248 = vmatpush.bf16.xpose.msra.mxu0 %v2165
    %2249 = vmatmul.bf16.gmra.mxu0 %v2052
    %v2250 = vpop.f32.mrf.mxu0
    %v2251 = vadd.f32 %v2238, %v2250
    %v2252 = vpop.f32.mrf.mxu0
    %2253 = vdwg.mxu0
    %2254 = vmatpush.bf16.xpose.msra.mxu0 0
    %2255 = vmatpush.bf16.xpose.msra.mxu0 0
    %2256 = vmatpush.bf16.xpose.msra.mxu0 0
    %2257 = vmatpush.bf16.xpose.msra.mxu0 0
    %2258 = vmatpush.bf16.xpose.msra.mxu0 0
    %2259 = vmatpush.bf16.xpose.msra.mxu0 0
    %2260 = vmatpush.bf16.xpose.msra.mxu0 %v2182
    %2261 = vmatpush.bf16.xpose.msra.mxu0 %v2166
    %2262 = vmatmul.bf16.gmra.mxu0 %v2053
    %v2263 = vpop.f32.mrf.mxu0
    %v2264 = vadd.f32 %v2251, %v2263
    %v2265 = vpop.f32.mrf.mxu0
    %2266 = vdwg.mxu0
    %2267 = vmatpush.bf16.xpose.msra.mxu0 0
    %2268 = vmatpush.bf16.xpose.msra.mxu0 0
    %2269 = vmatpush.bf16.xpose.msra.mxu0 0
    %2270 = vmatpush.bf16.xpose.msra.mxu0 0
    %2271 = vmatpush.bf16.xpose.msra.mxu0 0
    %2272 = vmatpush.bf16.xpose.msra.mxu0 0
    %2273 = vmatpush.bf16.xpose.msra.mxu0 %v2183
    %2274 = vmatpush.bf16.xpose.msra.mxu0 %v2167
    %2275 = vmatmul.bf16.gmra.mxu0 %v2054
    %v2276 = vpop.f32.mrf.mxu0
    %v2277 = vadd.f32 %v2264, %v2276
    %v2278 = vpop.f32.mrf.mxu0
    %2279 = vdwg.mxu0
    %2280 = vmatpush.bf16.xpose.msra.mxu0 0
    %2281 = vmatpush.bf16.xpose.msra.mxu0 0
    %2282 = vmatpush.bf16.xpose.msra.mxu0 0
    %2283 = vmatpush.bf16.xpose.msra.mxu0 0
    %2284 = vmatpush.bf16.xpose.msra.mxu0 0
    %2285 = vmatpush.bf16.xpose.msra.mxu0 0
    %2286 = vmatpush.bf16.xpose.msra.mxu0 %v2184
    %2287 = vmatpush.bf16.xpose.msra.mxu0 %v2168
    %2288 = vmatmul.bf16.gmra.mxu0 %v2055
    %v2289 = vpop.f32.mrf.mxu0
    %v2290 = vadd.f32 %v2277, %v2289
    %v2291 = vpop.f32.mrf.mxu0
    %2292 = vdwg.mxu0
    %2293 = vmatpush.bf16.xpose.msra.mxu0 0
    %2294 = vmatpush.bf16.xpose.msra.mxu0 0
    %2295 = vmatpush.bf16.xpose.msra.mxu0 0
    %2296 = vmatpush.bf16.xpose.msra.mxu0 0
    %2297 = vmatpush.bf16.xpose.msra.mxu0 0
    %2298 = vmatpush.bf16.xpose.msra.mxu0 0
    %2299 = vmatpush.bf16.xpose.msra.mxu0 %v2185
    %2300 = vmatpush.bf16.xpose.msra.mxu0 %v2169
    %2301 = vmatmul.bf16.gmra.mxu0 %v2056
    %v2302 = vpop.f32.mrf.mxu0
    %v2303 = vadd.f32 %v2290, %v2302
    %v2304 = vpop.f32.mrf.mxu0
    %2305 = vdwg.mxu0
    %2306 = vmatpush.bf16.xpose.msra.mxu0 0
    %2307 = vmatpush.bf16.xpose.msra.mxu0 0
    %2308 = vmatpush.bf16.xpose.msra.mxu0 0
    %2309 = vmatpush.bf16.xpose.msra.mxu0 0
    %2310 = vmatpush.bf16.xpose.msra.mxu0 0
    %2311 = vmatpush.bf16.xpose.msra.mxu0 0
    %2312 = vmatpush.bf16.xpose.msra.mxu0 %v2186
    %2313 = vmatpush.bf16.xpose.msra.mxu0 %v2170
    %2314 = vmatmul.bf16.gmra.mxu0 %v2057
    %v2315 = vpop.f32.mrf.mxu0
    %v2316 = vadd.f32 %v2303, %v2315
    %v2317 = vpop.f32.mrf.mxu0
    %2318 = vdwg.mxu0
    %2319 = vmatpush.bf16.xpose.msra.mxu0 0
    %2320 = vmatpush.bf16.xpose.msra.mxu0 0
    %2321 = vmatpush.bf16.xpose.msra.mxu0 0
    %2322 = vmatpush.bf16.xpose.msra.mxu0 0
    %2323 = vmatpush.bf16.xpose.msra.mxu0 0
    %2324 = vmatpush.bf16.xpose.msra.mxu0 0
    %2325 = vmatpush.bf16.xpose.msra.mxu0 %v2187
    %2326 = vmatpush.bf16.xpose.msra.mxu0 %v2171
    %2327 = vmatmul.bf16.gmra.mxu0 %v2058
    %v2328 = vpop.f32.mrf.mxu0
    %v2329 = vadd.f32 %v2316, %v2328
    %v2330 = vpop.f32.mrf.mxu0
    %2331 = vdwg.mxu0
    %2332 = vmatpush.bf16.xpose.msra.mxu0 0
    %2333 = vmatpush.bf16.xpose.msra.mxu0 0
    %2334 = vmatpush.bf16.xpose.msra.mxu0 0
    %2335 = vmatpush.bf16.xpose.msra.mxu0 0
    %2336 = vmatpush.bf16.xpose.msra.mxu0 0
    %2337 = vmatpush.bf16.xpose.msra.mxu0 0
    %2338 = vmatpush.bf16.xpose.msra.mxu0 %v2188
    %2339 = vmatpush.bf16.xpose.msra.mxu0 %v2172
    %2340 = vmatmul.bf16.gmra.mxu0 %v2059
    %v2341 = vpop.f32.mrf.mxu0
    %v2342 = vadd.f32 %v2329, %v2341
    %v2343 = vpop.f32.mrf.mxu0
    %2344 = vdwg.mxu0
    %2345 = vmatpush.bf16.xpose.msra.mxu0 0
    %2346 = vmatpush.bf16.xpose.msra.mxu0 0
    %2347 = vmatpush.bf16.xpose.msra.mxu0 0
    %2348 = vmatpush.bf16.xpose.msra.mxu0 0
    %2349 = vmatpush.bf16.xpose.msra.mxu0 0
    %2350 = vmatpush.bf16.xpose.msra.mxu0 0
    %2351 = vmatpush.bf16.xpose.msra.mxu0 %v2189
    %2352 = vmatpush.bf16.xpose.msra.mxu0 %v2173
    %2353 = vmatmul.bf16.gmra.mxu0 %v2060
    %v2354 = vpop.f32.mrf.mxu0
    %v2355 = vadd.f32 %v2342, %v2354
    %v2356 = vpop.f32.mrf.mxu0
    %2357 = vdwg.mxu0
    %2358 = vmatpush.bf16.xpose.msra.mxu0 0
    %2359 = vmatpush.bf16.xpose.msra.mxu0 0
    %2360 = vmatpush.bf16.xpose.msra.mxu0 0
    %2361 = vmatpush.bf16.xpose.msra.mxu0 0
    %2362 = vmatpush.bf16.xpose.msra.mxu0 0
    %2363 = vmatpush.bf16.xpose.msra.mxu0 0
    %2364 = vmatpush.bf16.xpose.msra.mxu0 %v2190
    %2365 = vmatpush.bf16.xpose.msra.mxu0 %v2174
    %2366 = vmatmul.bf16.gmra.mxu0 %v2061
    %v2367 = vpop.f32.mrf.mxu0
    %v2368 = vadd.f32 %v2355, %v2367
    %v2369 = vpop.f32.mrf.mxu0
    %2370 = vdwg.mxu0
    %2371 = vmatpush.bf16.xpose.msra.mxu0 0
    %2372 = vmatpush.bf16.xpose.msra.mxu0 0
    %2373 = vmatpush.bf16.xpose.msra.mxu0 0
    %2374 = vmatpush.bf16.xpose.msra.mxu0 0
    %2375 = vmatpush.bf16.xpose.msra.mxu0 0
    %2376 = vmatpush.bf16.xpose.msra.mxu0 0
    %2377 = vmatpush.bf16.xpose.msra.mxu0 %v2191
    %2378 = vmatpush.bf16.xpose.msra.mxu0 %v2175
    %2379 = vmatmul.bf16.gmra.mxu0 %v2062
    %v2380 = vpop.f32.mrf.mxu0
    %v2381 = vadd.f32 %v2368, %v2380
    %v2382 = vpop.f32.mrf.mxu0
    %2383 = vdwg.mxu0
    %2384 = vmatpush.bf16.xpose.msra.mxu0 0
    %2385 = vmatpush.bf16.xpose.msra.mxu0 0
    %2386 = vmatpush.bf16.xpose.msra.mxu0 0
    %2387 = vmatpush.bf16.xpose.msra.mxu0 0
    %2388 = vmatpush.bf16.xpose.msra.mxu0 0
    %2389 = vmatpush.bf16.xpose.msra.mxu0 0
    %2390 = vmatpush.bf16.xpose.msra.mxu0 %v2192
    %2391 = vmatpush.bf16.xpose.msra.mxu0 %v2176
    %2392 = vmatmul.bf16.gmra.mxu0 %v2063
    %v2393 = vpop.f32.mrf.mxu0
    %v2394 = vadd.f32 %v2381, %v2393
    %v2395 = vpop.f32.mrf.mxu0
    %2396 = vdwg.mxu0
    %2397 = vmatpush.bf16.xpose.msra.mxu0 0
    %2398 = vmatpush.bf16.xpose.msra.mxu0 0
    %2399 = vmatpush.bf16.xpose.msra.mxu0 0
    %2400 = vmatpush.bf16.xpose.msra.mxu0 0
    %2401 = vmatpush.bf16.xpose.msra.mxu0 0
    %2402 = vmatpush.bf16.xpose.msra.mxu0 0
    %2403 = vmatpush.bf16.xpose.msra.mxu0 %v2193
    %2404 = vmatpush.bf16.xpose.msra.mxu0 %v2177
    %2405 = vmatmul.bf16.gmra.mxu0 %v2064
    %v2406 = vpop.f32.mrf.mxu0
    %v2407 = vadd.f32 %v2394, %v2406
    %v2408 = vpop.f32.mrf.mxu0
    %2409 = vdwg.mxu0
    %2410 = vmatpush.bf16.xpose.msra.mxu0 0
    %2411 = vmatpush.bf16.xpose.msra.mxu0 0
    %2412 = vmatpush.bf16.xpose.msra.mxu0 0
    %2413 = vmatpush.bf16.xpose.msra.mxu0 0
    %2414 = vmatpush.bf16.xpose.msra.mxu0 0
    %2415 = vmatpush.bf16.xpose.msra.mxu0 0
    %2416 = vmatpush.bf16.xpose.msra.mxu0 %v2194
    %2417 = vmatpush.bf16.xpose.msra.mxu0 %v2178
    %2418 = vmatmul.bf16.gmra.mxu0 %v2065
    %v2419 = vpop.f32.mrf.mxu0
    %v2420 = vadd.f32 %v2407, %v2419
    %v2421 = vpop.f32.mrf.mxu0
    %2422 = vdwg.mxu0
    %2423 = vmatpush.bf16.xpose.msra.mxu0 0
    %2424 = vmatpush.bf16.xpose.msra.mxu0 0
    %2425 = vmatpush.bf16.xpose.msra.mxu0 0
    %2426 = vmatpush.bf16.xpose.msra.mxu0 0
    %2427 = vmatpush.bf16.xpose.msra.mxu0 0
    %2428 = vmatpush.bf16.xpose.msra.mxu0 0
    %2429 = vmatpush.bf16.xpose.msra.mxu0 %v2195
    %2430 = vmatpush.bf16.xpose.msra.mxu0 %v2179
    %2431 = vmatmul.bf16.gmra.mxu0 %v2066
    %v2432 = vpop.f32.mrf.mxu0
    %v2433 = vadd.f32 %v2420, %v2432
    %v2434 = vpop.f32.mrf.mxu0
    %2435 = vdwg.mxu0
    %v2436 = vadd.f32 %v1628, %v2433
    %v2437 = vsel %vm325, %v2436, 0.0
    %2438 = vadd.xlane.f32.xlu0 %v2437
    %v2439 = vpop.xlane.xlu0 %2438
    %v2440 = vmul.f32 %v2439, %v534
    %v2441 = vsub.f32 %v2436, %v2440
    %v2442 = vmul.f32 %v2441, %v2441
    %v2443 = vsel %vm325, %v2442, 0.0
    %2444 = vadd.xlane.f32.xlu0 %v2443
    %v2445 = vpop.xlane.xlu0 %2444
    %v2446 = vmul.f32 %v2445, %v534
    %v2447 = vadd.f32 %v2446, 1e-05
    %v2448 = vrsqrt.pop %v2447
    %v2449 = vmul.f32 %v2448, %v2447
    %v2450 = vmul.f32 %v2449, %v2448
    %v2451 = vmul.f32 0.5, %v2450
    %v2452 = vsub.f32 1.5, %v2451
    %v2453 = vmul.f32 %v2448, %v2452
    %vm2454 = vweird.f32 %v2447
    %vm2455 = vweird.f32 %v2448
    %vm2456 = vmor %vm2454, %vm2455
    %v2457 = vsel %vm2456, %v2448, %v2453
    %v2458 = vmul.f32 %v2441, %v2457
    %v2459 = vperm.slane %v285, 3
    %v2460 = vmul.f32 %v2458, %v2459
    %v2461 = vperm.slane %v285, 4
    %v2462 = vadd.f32 %v2460, %v2461
    %v2463 = vsel %vm325, %v2462, 0.0
    %2464 = vadd.xlane.f32.xlu0 %v2463
    %v2465 = vpop.xlane.xlu0 %2464
    %v2466 = vmul.f32 %v2465, %v534
    %v2467 = vsub.f32 %v2462, %v2466
    %v2468 = vmul.f32 %v2467, %v2467
    %v2469 = vsel %vm325, %v2468, 0.0
    %2470 = vadd.xlane.f32.xlu0 %v2469
    %v2471 = vpop.xlane.xlu0 %2470
    %v2472 = vmul.f32 %v2471, %v534
    %v2473 = vadd.f32 %v2472, 1e-05
    %v2474 = vrsqrt.pop %v2473
    %v2475 = vmul.f32 %v2474, %v2473
    %v2476 = vmul.f32 %v2475, %v2474
    %v2477 = vmul.f32 0.5, %v2476
    %v2478 = vsub.f32 1.5, %v2477
    %v2479 = vmul.f32 %v2474, %v2478
    %vm2480 = vweird.f32 %v2473
    %vm2481 = vweird.f32 %v2474
    %vm2482 = vmor %vm2480, %vm2481
    %v2483 = vsel %vm2482, %v2474, %v2479
    %v2484 = vmul.f32 %v2467, %v2483
    %v2485 = vperm.slane %v283, 1
    %v2486 = vmul.f32 %v2484, %v2485
    %v2487 = vperm.slane %v283, 2
    %v2488 = vadd.f32 %v2486, %v2487
    %v2489 = vperm.slane %v283, 3
    %v2491 = vsel %vm325, %v2488, 0
    %2493 = vmatpush.msra.mxu0 0.0
    %2494 = vmatpush.msra.mxu0 0.0
    %2495 = vmatpush.msra.mxu0 0.0
    %2496 = vmatpush.msra.mxu0 0.0
    %2497 = vmatpush.msra.mxu0 0.0
    %2498 = vmatpush.msra.mxu0 0.0
    %2499 = vmatpush.msra.mxu0 0.0
    %2500 = vmatpush.msra.mxu0 0.0
    %2501 = vmatpush.msra.mxu0 0.0
    %2502 = vmatpush.msra.mxu0 0.0
    %2503 = vmatpush.msra.mxu0 0.0
    %2504 = vmatpush.msra.mxu0 0.0
    %2505 = vmatpush.msra.mxu0 %v282
    %2506 = vmatpush.msra.mxu0 %v281
    %2507 = vmatpush.msra.mxu0 %v280
    %2508 = vmatpush.msra.mxu0 %v279
    %2509 = vmatmul.f32.gmra.mxu0 %v2491
    %v2510 = vpop.f32.mrf.mxu0
    %v2511 = vadd.f32 %v2489, %v2510
    %2512 = vdwg.mxu0
    %v2513 = vsub.f32 0.0, %v2511
    %v2514 = vmul.f32 %v2513, 1.442695
    %v2515 = vpow.pop %v2514
    %v2516 = vadd.f32 %v2515, 1.0
    %v2517 = vrcp.pop %v2516
    %2518 = vst.msk [vmem:[#allocation13] sm:$0xff] %vm385, %v2517
    // Predicated region
    $region62: #{tpu_custom_call.1} parent=1 // pred_check
      _
    $region63: #{tpu_custom_call.1} parent=1 // pred_check_branch
      %2520 = sbr.rel (0) target = $region65
    $region64: #{tpu_custom_call.1} parent=1 // pred_region
      %2522 = vsyncadd [#allocation4], 0
      %s2524 = sshll.u32 [#allocation13], 4
      %s2525 = int_to_ptr.vmem [resolvable:$true] %s2524
      %s2526 = sshll.u32 %s9, 4
      %s2527 = int_to_ptr.hbm [resolvable:$true] %s2526
      %2529 = dma.vmem_to_hbm [thread:$0]  %s2525, 128, %s2527, [#allocation4]
    $region65: #{tpu_custom_call.1} parent=1 // pred_fallthru
      _
    // Predicated region
    $region66: #{tpu_custom_call.1} parent=1 // pred_check
      _
    $region67: #{tpu_custom_call.1} parent=1 // pred_check_branch
      %2531 = sbr.rel (0) target = $region69
    $region68: #{tpu_custom_call.1} parent=1 // pred_region
      %2533 = dma.done [#allocation4], 128
    $region69: #{tpu_custom_call.1} parent=1 // pred_fallthru
      _
    %2534 = vsyncpa [#allocation3], 1
    %2535 = vsyncpa [#allocation6], 1
    %2536 = vsyncpa [#allocation9], 1
    %2537 = vsyncpa [#allocation12], 1
    %2538 = vsyncpa [#allocation4], 1

</llo_original>
